<compile_context>
chip_gen: v7x
topology: tpu7x:2x2x1
jax: 0.10.0
libtpu: 0.0.40
codegen_flags: <defaults>
</compile_context>

<pallas_src>
import jax
import jax.numpy as jnp
from jax import lax
from jax.experimental import pallas as pl
from jax.experimental.pallas import tpu as pltpu


def pooled_regression_kernel(ids_ref, inv_cnt_ref, table_ref, w_ref, b_ref,
                             out_ref, acc_ref):
    """Fused embedding lookup + masked-sum pooling + linear head.

    Grid = (B // b_blk, S // s_blk); axis 0 "parallel" (batch), axis 1 "arbitrary" (seq reduction).

    ids_ref     : (b_blk, s_blk) int32  pre-masked token ids (pad positions = -1)
    inv_cnt_ref : (b_blk, 1)     f32    1 / max(token_count, eps), precomputed in the wrapper
    table_ref   : (V_pad, E)     bf16   zero-padded embedding table (embedder stand-in)
    w_ref       : (E, O_pad)     f32    regression-head weight (transposed, lane-padded)
    b_ref       : (1, O_pad)     f32    regression-head bias (lane-padded)
    out_ref     : (b_blk, O_pad) f32    predictions (written at the last sequence step)
    acc_ref     : (b_blk, E)     f32    scratch: masked embedding-sum accumulator
    """
    si = pl.program_id(1)

    @pl.when(si == 0)
    def _init():
        acc_ref[...] = jnp.zeros_like(acc_ref)

    vocab = table_ref.shape[0]

    # One-hot token counts for this sequence chunk.  Pad tokens were set to -1 in the
    # wrapper and match nothing in [0, V_pad), so no mask stream / per-element select is
    # needed here.  The iota is (1, 1, V) and relies on broadcasting in the compare.
    ids = ids_ref[...]                                               # (b_blk, s_blk) int32
    vocab_iota = lax.broadcasted_iota(jnp.int32, (1, 1, vocab), 2)   # (1, 1, V_pad)
    onehot = ids[:, :, None] == vocab_iota                           # (b_blk, s_blk, V_pad)
    cnt_v = jnp.sum(onehot.astype(jnp.float32), axis=1)              # (b_blk, V_pad) exact ints

    # Fused gather + masked sum over the chunk as one MXU bf16 contraction:
    #   sum_s [id valid] * table[ids[b, s], :]  ==  cnt_v @ table
    # cnt_v <= s_blk <= 256, so the bf16 cast of the counts is exact.
    acc_ref[...] += jnp.dot(cnt_v.astype(jnp.bfloat16), table_ref[...],
                            preferred_element_type=jnp.float32)      # (b_blk, E) f32

    @pl.when(si == pl.num_programs(1) - 1)
    def _finalize():
        # Normalize after the head matmul (equal by linearity): y = (sum @ W) * (1/n) + b.
        y = jnp.dot(acc_ref[...], w_ref[...], preferred_element_type=jnp.float32)
        out_ref[...] = y * inv_cnt_ref[...] + b_ref[...]


def text_regressor_forward(input_ids, attention_mask, embed_table, head_w, head_b,
                           *, b_blk=None, s_blk=None):
    """TextRegressor.forward: embedder (table lookup) -> masked mean pooling -> Linear head.

    input_ids      : (B, S) int
    attention_mask : (B, S) int / float (0/1)
    embed_table    : (V, E) f32   -- embedder stand-in (token embedding table)
    head_w         : (O, E) f32   -- nn.Linear(embed_dim, output_dim).weight
    head_b         : (O,)   f32   -- nn.Linear bias
    returns        : (B, O) f32
    """
    B, S = input_ids.shape
    V, E = embed_table.shape
    O = head_w.shape[0]
    O_pad = ((O + 127) // 128) * 128            # lane-dense head output (unmasked vst)
    V_pad = ((V + 127) // 128) * 128            # dense one-hot lanes + full MXU K dim

    # --- tile-size selection -------------------------------------------------------------
    if s_blk is None:
        # >= 2 sequence steps when possible (overlaps ids DMA with compute); <= 256 keeps
        # per-chunk counts exact in bf16; multiples of 128 keep the ids block lane-aligned.
        s_blk = None
        for cand in (256, 128):
            if S % cand == 0 and S // cand >= 2:
                s_blk = cand
                break
        if s_blk is None:
            s_blk = 128 if S % 128 == 0 else S
    assert S % s_blk == 0, "s_blk must divide S"
    assert s_blk % 128 == 0 or s_blk == S, "ids block last dim must be 128-aligned or full"
    assert s_blk <= 256, "s_blk > 256 would make per-chunk counts inexact in bf16"

    if b_blk is None:
        # Fill the MXU M dim, but keep the (b_blk, s_blk, V_pad) f32 one-hot <= ~2 MiB.
        onehot_budget = 2 * 1024 * 1024
        cap = max(8, onehot_budget // (s_blk * V_pad * 4))
        b_blk = B
        for cand in (256, 128, 64, 32, 16, 8):
            if cand <= min(cap, B) and B % cand == 0:
                b_blk = cand
                break
        # Keep >= 2 blocks on the "parallel" batch axis when possible (v7x: 2 TensorCores).
        if B // b_blk < 2:
            half = B // 2
            if half >= 1 and B % half == 0 and (half % 8 == 0 or half == B):
                b_blk = half
    assert B % b_blk == 0, "b_blk must divide B"
    assert b_blk % 8 == 0 or b_blk == B, "ids block sublane dim must be 8-aligned or full"
    n_b, n_s = B // b_blk, S // s_blk

    # --- kernel-friendly input prep (cheap, O(B*S) / O(params)) ---------------------------
    valid = attention_mask > 0
    ids_masked = jnp.where(valid, input_ids.astype(jnp.int32), -1)           # pad -> no match
    counts = attention_mask.astype(jnp.float32).sum(axis=1, keepdims=True)   # (B, 1)
    inv_counts = 1.0 / jnp.maximum(counts, 1e-9)                              # exact divide

    table_pad = jnp.zeros((V_pad, E), jnp.bfloat16).at[:V, :].set(
        embed_table.astype(jnp.bfloat16))                                     # bf16 stream, f32 acc
    w_pad = jnp.zeros((E, O_pad), jnp.float32).at[:, :O].set(head_w.T.astype(jnp.float32))
    b_pad = jnp.zeros((1, O_pad), jnp.float32).at[:, :O].set(
        head_b.reshape(1, O).astype(jnp.float32))

    # Advisory cost estimate (one-hot contraction + head matmul; compare/reduce as VPU flops).
    flops = 2 * B * V_pad * E * n_s + 2 * B * E * O_pad + 2 * B * S * V_pad
    bytes_accessed = (B * S * 4 + B * 4 + V_pad * E * 2 + E * O_pad * 4
                      + O_pad * 4 + B * O_pad * 4)

    grid_spec = pltpu.PrefetchScalarGridSpec(
        num_scalar_prefetch=0,
        grid=(n_b, n_s),
        in_specs=[
            pl.BlockSpec((b_blk, s_blk), lambda bi, si: (bi, si)),     # pre-masked ids (2-D)
            pl.BlockSpec((b_blk, 1), lambda bi, si: (bi, 0)),          # 1/count (resident per bi)
            pl.BlockSpec((V_pad, E), lambda bi, si: (0, 0)),           # embed table (resident)
            pl.BlockSpec((E, O_pad), lambda bi, si: (0, 0)),           # head weight (resident)
            pl.BlockSpec((1, O_pad), lambda bi, si: (0, 0)),           # head bias (resident)
        ],
        out_specs=pl.BlockSpec((b_blk, O_pad), lambda bi, si: (bi, 0)),
        scratch_shapes=[
            pltpu.VMEM((b_blk, E), jnp.float32),                       # embedding-sum accumulator
        ],
    )

    out_pad = pl.pallas_call(
        pooled_regression_kernel,
        out_shape=jax.ShapeDtypeStruct((B, O_pad), jnp.float32),
        grid_spec=grid_spec,
        compiler_params=pltpu.CompilerParams(
            dimension_semantics=("parallel", "arbitrary"),   # batch across cores, seq = reduction
            vmem_limit_bytes=48 * 1024 * 1024,               # <= v7x's 64 MiB physical VMEM
        ),
        cost_estimate=pl.CostEstimate(flops=flops, transcendentals=0,
                                      bytes_accessed=bytes_accessed),
    )(ids_masked, inv_counts, table_pad, w_pad, b_pad)

    return out_pad[:, :O]


if __name__ == "__main__":
    # Small shapes, but large enough to exercise a real (batch, seq) grid: grid = (2, 2).
    B, S, E, O = 16, 256, 128, 1
    VOCAB = 64

    key = jax.random.PRNGKey(0)
    k_tok, k_len, k_emb, k_w, k_b = jax.random.split(key, 5)

    # Deterministic inputs with per-example padding.
    input_ids = jax.random.randint(k_tok, (B, S), 0, VOCAB, dtype=jnp.int32)
    lengths = jax.random.randint(k_len, (B,), 4, S + 1, dtype=jnp.int32)
    attention_mask = (jnp.arange(S, dtype=jnp.int32)[None, :] < lengths[:, None]).astype(jnp.int32)

    # Deterministic parameters (synthetic init, shapes from __init__).
    embed_table = jax.random.normal(k_emb, (VOCAB, E), dtype=jnp.float32) * 0.02
    head_w = jax.random.normal(k_w, (O, E), dtype=jnp.float32) * (1.0 / jnp.sqrt(E))
    head_b = jax.random.normal(k_b, (O,), dtype=jnp.float32) * 0.01

    yhat = text_regressor_forward(input_ids, attention_mask, embed_table, head_w, head_b)
    yhat = jax.block_until_ready(yhat)

    # Pure-JAX f32 reference of the same forward semantics.
    emb_ref = jnp.take(embed_table, input_ids, axis=0)
    m = attention_mask.astype(jnp.float32)
    pooled_ref = (emb_ref * m[:, :, None]).sum(1) / jnp.maximum(m.sum(1, keepdims=True), 1e-9)
    yhat_ref = pooled_ref @ head_w.T + head_b

    assert yhat.shape == (B, O)
    # bf16 embedding stream -> slightly looser tolerance than pure f32.
    assert jnp.allclose(yhat, yhat_ref, atol=2e-3, rtol=2e-2), (
        float(jnp.max(jnp.abs(yhat - yhat_ref))))

    print("KERNEL_OK")
</pallas_src>

<mosaic_0001>
module attributes {stable_mosaic.version = 11 : i64} {
  func.func @pooled_regression_kernel(%arg0: i32, %arg1: i32, %arg2: memref<8x128xi32, #tpu.memory_space<vmem>>, %arg3: memref<8x1xf32, #tpu.memory_space<vmem>>, %arg4: memref<128x128xbf16, #tpu.memory_space<vmem>>, %arg5: memref<128x128xf32, #tpu.memory_space<vmem>>, %arg6: memref<1x128xf32, #tpu.memory_space<vmem>>, %arg7: memref<8x128xf32, #tpu.memory_space<vmem>>, %arg8: memref<8x128xf32, #tpu.memory_space<vmem>>) attributes {dimension_semantics = [#tpu.dimension_semantics<parallel>, #tpu.dimension_semantics<arbitrary>], iteration_bounds = array<i64: 2, 2>, scalar_prefetch = 0 : i64, scratch_operands = 1 : i64, tpu.core_type = #tpu.core_type<tc>, window_params = [{transform_indices = @transform_0, window_bounds = array<i64: 8, 128>}, {transform_indices = @transform_1, window_bounds = array<i64: 8, 1>}, {pipeline_mode = #tpu.pipeline_mode<synchronous>, transform_indices = @transform_2, window_bounds = array<i64: 128, 128>}, {pipeline_mode = #tpu.pipeline_mode<synchronous>, transform_indices = @transform_3, window_bounds = array<i64: 128, 128>}, {pipeline_mode = #tpu.pipeline_mode<synchronous>, transform_indices = @transform_4, window_bounds = array<i64: 1, 128>}, {transform_indices = @transform_5, window_bounds = array<i64: 8, 128>}]} {
    %c0_i32 = arith.constant 0 : i32
    %0 = arith.cmpi eq, %arg1, %c0_i32 : i32
    %1 = arith.extui %0 : i1 to i32
    %c0_i32_0 = arith.constant 0 : i32
    %2 = arith.cmpi ne, %1, %c0_i32_0 : i32
    scf.if %2 {
      %cst_10 = arith.constant 0.000000e+00 : f32
      %21 = vector.broadcast %cst_10 : f32 to vector<8x128xf32>
      %c0_11 = arith.constant 0 : index
      %c0_12 = arith.constant 0 : index
      %22 = vector.load %arg8[%c0_11, %c0_12] : memref<8x128xf32, #tpu.memory_space<vmem>>, vector<8x128xf32>
      tpu.vector_store %arg8[%c0_11, %c0_12], %21 {strides = array<i32>} : memref<8x128xf32, #tpu.memory_space<vmem>>, vector<8x128xf32>,
    } else {
    }
    %c0 = arith.constant 0 : index
    %c0_1 = arith.constant 0 : index
    %3 = vector.load %arg2[%c0, %c0_1] : memref<8x128xi32, #tpu.memory_space<vmem>>, vector<8x128xi32>
    %4 = tpu.iota {dimensions = array<i32: 2>} : vector<1x1x128xi32>
    %5 = vector.shape_cast %3 : vector<8x128xi32> to vector<8x128x1xi32>
    %6 = vector.broadcast %5 : vector<8x128x1xi32> to vector<8x128x128xi32>
    %7 = vector.broadcast %4 : vector<1x1x128xi32> to vector<8x128x128xi32>
    %8 = arith.cmpi eq, %6, %7 : vector<8x128x128xi32>
    %9 = arith.extui %8 : vector<8x128x128xi1> to vector<8x128x128xi32>
    %10 = arith.sitofp %9 : vector<8x128x128xi32> to vector<8x128x128xf32>
    %cst = arith.constant dense<0.000000e+00> : vector<8x128xf32>
    %11 = vector.multi_reduction <add>, %10, %cst [1] : vector<8x128x128xf32> to vector<8x128xf32>
    %c0_2 = arith.constant 0 : index
    %c0_3 = arith.constant 0 : index
    %12 = vector.load %arg8[%c0_2, %c0_3] : memref<8x128xf32, #tpu.memory_space<vmem>>, vector<8x128xf32>
    %13 = arith.truncf %11 : vector<8x128xf32> to vector<8x128xbf16>
    %c0_4 = arith.constant 0 : index
    %c0_5 = arith.constant 0 : index
    %14 = vector.load %arg4[%c0_4, %c0_5] : memref<128x128xbf16, #tpu.memory_space<vmem>>, vector<128x128xbf16>
    %cst_6 = arith.constant dense<0.000000e+00> : vector<8x128xf32>
    %15 = tpu.matmul %13, %14, %cst_6 {dimension_numbers = #tpu.dot_dimension_numbers<[1], [0], [0], [1], [0, 0, 1, 1], [], []>} : vector<8x128xbf16>, vector<128x128xbf16>, vector<8x128xf32> -> vector<8x128xf32>
    %16 = arith.addf %12, %15 : vector<8x128xf32>
    %c0_7 = arith.constant 0 : index
    %c0_8 = arith.constant 0 : index
    %17 = vector.load %arg8[%c0_7, %c0_8] : memref<8x128xf32, #tpu.memory_space<vmem>>, vector<8x128xf32>
    tpu.vector_store %arg8[%c0_7, %c0_8], %16 {strides = array<i32>} : memref<8x128xf32, #tpu.memory_space<vmem>>, vector<8x128xf32>,
    %c1_i32 = arith.constant 1 : i32
    %18 = arith.cmpi eq, %arg1, %c1_i32 : i32
    %19 = arith.extui %18 : i1 to i32
    %c0_i32_9 = arith.constant 0 : i32
    %20 = arith.cmpi ne, %19, %c0_i32_9 : i32
    scf.if %20 {
      %c0_10 = arith.constant 0 : index
      %c0_11 = arith.constant 0 : index
      %21 = vector.load %arg8[%c0_10, %c0_11] : memref<8x128xf32, #tpu.memory_space<vmem>>, vector<8x128xf32>
      %c0_12 = arith.constant 0 : index
      %c0_13 = arith.constant 0 : index
      %22 = vector.load %arg5[%c0_12, %c0_13] : memref<128x128xf32, #tpu.memory_space<vmem>>, vector<128x128xf32>
      %cst_14 = arith.constant dense<0.000000e+00> : vector<8x128xf32>
      %23 = tpu.matmul %21, %22, %cst_14 {dimension_numbers = #tpu.dot_dimension_numbers<[1], [0], [0], [1], [0, 0, 1, 1], [], []>} : vector<8x128xf32>, vector<128x128xf32>, vector<8x128xf32> -> vector<8x128xf32>
      %c0_15 = arith.constant 0 : index
      %c0_16 = arith.constant 0 : index
      %24 = vector.load %arg3[%c0_15, %c0_16] : memref<8x1xf32, #tpu.memory_space<vmem>>, vector<8x1xf32>
      %25 = vector.broadcast %24 : vector<8x1xf32> to vector<8x128xf32>
      %26 = arith.mulf %23, %25 : vector<8x128xf32>
      %c0_17 = arith.constant 0 : index
      %c0_18 = arith.constant 0 : index
      %27 = vector.load %arg6[%c0_17, %c0_18] : memref<1x128xf32, #tpu.memory_space<vmem>>, vector<1x128xf32>
      %28 = vector.broadcast %27 : vector<1x128xf32> to vector<8x128xf32>
      %29 = arith.addf %26, %28 : vector<8x128xf32>
      %c0_19 = arith.constant 0 : index
      %c0_20 = arith.constant 0 : index
      %30 = vector.load %arg7[%c0_19, %c0_20] : memref<8x128xf32, #tpu.memory_space<vmem>>, vector<8x128xf32>
      tpu.vector_store %arg7[%c0_19, %c0_20], %29 {strides = array<i32>} : memref<8x128xf32, #tpu.memory_space<vmem>>, vector<8x128xf32>,
    } else {
    }
    return
  }
  func.func @transform_0(%arg0: i32, %arg1: i32) -> (i32, i32) {
    %c0_i32 = arith.constant 0 : i32
    return %arg0, %arg1 : i32, i32
  }
  func.func @transform_1(%arg0: i32, %arg1: i32) -> (i32, i32) {
    %c0_i32 = arith.constant 0 : i32
    %c0_i32_0 = arith.constant 0 : i32
    return %arg0, %c0_i32 : i32, i32
  }
  func.func @transform_2(%arg0: i32, %arg1: i32) -> (i32, i32) {
    %c0_i32 = arith.constant 0 : i32
    %c0_i32_0 = arith.constant 0 : i32
    %c0_i32_1 = arith.constant 0 : i32
    return %c0_i32, %c0_i32_0 : i32, i32
  }
  func.func @transform_3(%arg0: i32, %arg1: i32) -> (i32, i32) {
    %c0_i32 = arith.constant 0 : i32
    %c0_i32_0 = arith.constant 0 : i32
    %c0_i32_1 = arith.constant 0 : i32
    return %c0_i32, %c0_i32_0 : i32, i32
  }
  func.func @transform_4(%arg0: i32, %arg1: i32) -> (i32, i32) {
    %c0_i32 = arith.constant 0 : i32
    %c0_i32_0 = arith.constant 0 : i32
    %c0_i32_1 = arith.constant 0 : i32
    return %c0_i32, %c0_i32_0 : i32, i32
  }
  func.func @transform_5(%arg0: i32, %arg1: i32) -> (i32, i32) {
    %c0_i32 = arith.constant 0 : i32
    %c0_i32_0 = arith.constant 0 : i32
    return %arg0, %c0_i32 : i32, i32
  }
}

</mosaic_0001>

<llo_original>
// kernel: tpu_custom_call.1
$region0: #{tpu_custom_call.1}
  #allocation0 [shape = 'u32[]', space=smem, size = 0x4, offset = 0x4, fixed_abs, tag = 'smem constant byte address 0x4 - core index']
  #allocation1 [shape = 'u32[144,128]{1,0:T(1,128)}', space=vmem, size = 0x12000, scoped, tag = 'internal scratch']
  #allocation2 [shape = 'f32[8,128]{1,0:T(8,128)}', space=vmem, size = 0x1000, scoped, tag = 'scratch operand']
  %s0 = inlined_call_operand.hbm [shape: s32[16,256], index: 0, kind: input, shape index: {}]
  %s1 = inlined_call_operand.vmem [shape: f32[16,1], index: 1, kind: input, shape index: {}]
  %s2 = inlined_call_operand.hbm [shape: bf16[128,128], index: 2, kind: input, shape index: {}]
  %s3 = inlined_call_operand.hbm [shape: f32[128,128], index: 3, kind: input, shape index: {}]
  %s4 = inlined_call_operand.vmem [shape: f32[1,128], index: 4, kind: input, shape index: {}]
  %s5 = inlined_call_operand.hbm [shape: f32[16,128], index: 5, kind: output, shape index: {}]
  %s6 = sld [smem:[#allocation0]]
  $region73: #{tpu_custom_call.1} parent=0
    _
  %s8 = ssub.s32 1, %s6
  %s9 = scalar_select 0, %s8, %s6
  $region1: #{tpu_custom_call.1} parent=0
    #allocation3 [shape = 'u8[8192]{0}', space=vmem, size = 0x2000, scoped, tag = 'input window, operand 0']
    #allocation4 [shape = 's32[2]{0}', space=sflag, size = 0x8, scoped, tag = 'scoped memory for tpu_custom_call.1']
    #allocation5 [shape = 's32[2]{0}', space=sflag, size = 0x8, scoped, tag = 'scoped memory for tpu_custom_call.1']
    #allocation6 [shape = 'u8[32768]{0}', space=vmem, size = 0x8000, scoped, tag = 'input window, operand 2, single buffered']
    #allocation7 [shape = 's32[1]{0}', space=sflag, size = 0x4, scoped, tag = 'scoped memory for tpu_custom_call.1']
    #allocation8 [shape = 'u8[65536]{0}', space=vmem, size = 0x10000, scoped, tag = 'input window, operand 3, single buffered']
    #allocation9 [shape = 'u8[8192]{0}', space=vmem, size = 0x2000, scoped, tag = 'output window, operand 0']
    %10 = vsyncpa [#allocation4], 0
    %s11 = scalar_lea.sflag [#allocation4], 1
    %12 = vsyncpa %s11, 0
    %13 = vsyncpa [#allocation7], 0
    %14 = vsyncpa [#allocation5], 0
    %s15 = scalar_lea.sflag [#allocation5], 1
    %16 = vsyncpa %s15, 0
    loop: start=0, step=1, limit=6
    $region2: #{tpu_custom_call.1} parent=1 // loop_pre_header
      _
    $region3: #{tpu_custom_call.1} parent=1 // loop_header
      %s18 = sphi 0, %s22
      %p19 = scmp.ge.s32.totalorder %s18, 6
      %s25 = sphi 0, %s37
      %s26 = sphi 0, %s33
      %s27 = sphi 0, %s25
      %s28 = sphi 0, %s26
      %s29 = sphi 0, %s27
      %s30 = sphi 0, %s28
      %s42 = sphi 0, %s44
      %s45 = sphi 0, %s42
      %s46 = sphi 0, %s45
      %s62 = sphi 0, %s46
      %s68 = sphi 0, %s70
      %s71 = sphi 0, %s68
      %s72 = sphi 0, %s71
      %s88 = sphi 0, %s72
      %s92 = sphi 0, %s92
      %s94 = sphi 0, %s92
      %s95 = sphi 0, %s94
      %s109 = sphi 0, %s95
      %s113 = sphi 0, %s113
      %s115 = sphi 0, %s113
      %s116 = sphi 0, %s115
      %s130 = sphi 0, %s116
      %s134 = sphi 0, %s134
      %s136 = sphi 0, %s134
      %s137 = sphi 0, %s136
      %s151 = sphi 0, %s137
      %s157 = sphi 0, %s159
      %s160 = sphi 0, %s157
      %s161 = sphi 0, %s160
      %s177 = sphi 0, %s161
    $region4: #{tpu_custom_call.1} parent=1 // loop_header_branch
      %21 = sbr.rel (%p19) target = $region8
    $region5: #{tpu_custom_call.1} parent=1 // loop_body
      %s23 = ssub.s32 %s18, 1
      %s24 = ssub.s32 %s18, 2
      %s31 = sadd.s32 1, %s26
      %p32 = scmp.ge.s32.totalorder %s31, 2
      %s33 = scalar_select %p32, 0, %s31
      %s34 = sadd.s32 1, %s25
      %s35 = scalar_select %p32, %s34, %s25
      %p36 = scmp.ge.s32.totalorder %s35, 2
      %s37 = scalar_select %p36, 0, %s35
      %s38 = ssub.s32 %s25, %s37
      %s39 = ssub.s32 %s26, %s33
      %s40 = sor.u32 %s38, %s39
      %p41 = scmp.eq.s32.totalorder %s40, 0
      %s43 = sadd.s32 %s42, 1
      %s44 = scalar_select %p41, %s42, %s43
      %p47 = pneg %p41
      %p48 = scmp.eq.s32.totalorder %s18, 3
      %p49 = por %p47, %p48
      %p50 = scmp.ne.s32.totalorder %s42, %s45
      %p51 = scmp.eq.s32.totalorder %s18, 0
      %p52 = por %p50, %p51
      %p53 = scmp.ne.s32.totalorder %s42, %s45
      %p54 = scmp.eq.s32.totalorder %s23, 3
      %p55 = por %p53, %p54
      %p56 = scmp.ne.s32.totalorder %s45, %s46
      %p57 = scmp.eq.s32.totalorder %s23, 0
      %p58 = por %p56, %p57
      %p59 = scmp.ne.s32.totalorder %s45, %s46
      %p60 = scmp.eq.s32.totalorder %s24, 3
      %p61 = por %p59, %p60
      %p63 = scmp.ne.s32.totalorder %s46, %s62
      %p64 = scmp.eq.s32.totalorder %s24, 0
      %p65 = por %p63, %p64
      %s66 = ssub.s32 %s25, %s37
      %p67 = scmp.eq.s32.totalorder %s66, 0
      %s69 = sadd.s32 %s68, 1
      %s70 = scalar_select %p67, %s68, %s69
      %p73 = pneg %p67
      %p74 = scmp.eq.s32.totalorder %s18, 3
      %p75 = por %p73, %p74
      %p76 = scmp.ne.s32.totalorder %s68, %s71
      %p77 = scmp.eq.s32.totalorder %s18, 0
      %p78 = por %p76, %p77
      %p79 = scmp.ne.s32.totalorder %s68, %s71
      %p80 = scmp.eq.s32.totalorder %s23, 3
      %p81 = por %p79, %p80
      %p82 = scmp.ne.s32.totalorder %s71, %s72
      %p83 = scmp.eq.s32.totalorder %s23, 0
      %p84 = por %p82, %p83
      %p85 = scmp.ne.s32.totalorder %s71, %s72
      %p86 = scmp.eq.s32.totalorder %s24, 3
      %p87 = por %p85, %p86
      %p89 = scmp.ne.s32.totalorder %s72, %s88
      %p90 = scmp.eq.s32.totalorder %s24, 0
      %p91 = por %p89, %p90
      %s93 = sadd.s32 %s92, 1
      %p96 = scmp.eq.s32.totalorder %s18, 3
      %p97 = scmp.ne.s32.totalorder %s92, %s94
      %p98 = scmp.eq.s32.totalorder %s18, 0
      %p99 = por %p97, %p98
      %p100 = scmp.ne.s32.totalorder %s92, %s94
      %p101 = scmp.eq.s32.totalorder %s23, 3
      %p102 = por %p100, %p101
      %p103 = scmp.ne.s32.totalorder %s94, %s95
      %p104 = scmp.eq.s32.totalorder %s23, 0
      %p105 = por %p103, %p104
      %p106 = scmp.ne.s32.totalorder %s94, %s95
      %p107 = scmp.eq.s32.totalorder %s24, 3
      %p108 = por %p106, %p107
      %p110 = scmp.ne.s32.totalorder %s95, %s109
      %p111 = scmp.eq.s32.totalorder %s24, 0
      %p112 = por %p110, %p111
      %s114 = sadd.s32 %s113, 1
      %p117 = scmp.eq.s32.totalorder %s18, 3
      %p118 = scmp.ne.s32.totalorder %s113, %s115
      %p119 = scmp.eq.s32.totalorder %s18, 0
      %p120 = por %p118, %p119
      %p121 = scmp.ne.s32.totalorder %s113, %s115
      %p122 = scmp.eq.s32.totalorder %s23, 3
      %p123 = por %p121, %p122
      %p124 = scmp.ne.s32.totalorder %s115, %s116
      %p125 = scmp.eq.s32.totalorder %s23, 0
      %p126 = por %p124, %p125
      %p127 = scmp.ne.s32.totalorder %s115, %s116
      %p128 = scmp.eq.s32.totalorder %s24, 3
      %p129 = por %p127, %p128
      %p131 = scmp.ne.s32.totalorder %s116, %s130
      %p132 = scmp.eq.s32.totalorder %s24, 0
      %p133 = por %p131, %p132
      %s135 = sadd.s32 %s134, 1
      %p138 = scmp.eq.s32.totalorder %s18, 3
      %p139 = scmp.ne.s32.totalorder %s134, %s136
      %p140 = scmp.eq.s32.totalorder %s18, 0
      %p141 = por %p139, %p140
      %p142 = scmp.ne.s32.totalorder %s134, %s136
      %p143 = scmp.eq.s32.totalorder %s23, 3
      %p144 = por %p142, %p143
      %p145 = scmp.ne.s32.totalorder %s136, %s137
      %p146 = scmp.eq.s32.totalorder %s23, 0
      %p147 = por %p145, %p146
      %p148 = scmp.ne.s32.totalorder %s136, %s137
      %p149 = scmp.eq.s32.totalorder %s24, 3
      %p150 = por %p148, %p149
      %p152 = scmp.ne.s32.totalorder %s137, %s151
      %p153 = scmp.eq.s32.totalorder %s24, 0
      %p154 = por %p152, %p153
      %s155 = ssub.s32 %s25, %s37
      %p156 = scmp.eq.s32.totalorder %s155, 0
      %s158 = sadd.s32 %s157, 1
      %s159 = scalar_select %p156, %s157, %s158
      %p162 = pneg %p156
      %p163 = scmp.eq.s32.totalorder %s18, 3
      %p164 = por %p162, %p163
      %p165 = scmp.ne.s32.totalorder %s157, %s160
      %p166 = scmp.eq.s32.totalorder %s18, 0
      %p167 = por %p165, %p166
      %p168 = scmp.ne.s32.totalorder %s157, %s160
      %p169 = scmp.eq.s32.totalorder %s23, 3
      %p170 = por %p168, %p169
      %p171 = scmp.ne.s32.totalorder %s160, %s161
      %p172 = scmp.eq.s32.totalorder %s23, 0
      %p173 = por %p171, %p172
      %p174 = scmp.ne.s32.totalorder %s160, %s161
      %p175 = scmp.eq.s32.totalorder %s24, 3
      %p176 = por %p174, %p175
      %p178 = scmp.ne.s32.totalorder %s161, %s177
      %p179 = scmp.eq.s32.totalorder %s24, 0
      %p180 = por %p178, %p179
      %p181 = scmp.le.s32.totalorder 1, %s18
      %p182 = scmp.lt.s32.totalorder %s18, 5
      %p183 = pnand %p181, %p182
      %p184 = pneg %p183
      // Predicated region
      $region9: #{tpu_custom_call.1} parent=5 // pred_check
        _
      $region10: #{tpu_custom_call.1} parent=5 // pred_check_branch
        %186 = sbr.rel (%p183) target = $region12
      $region11: #{tpu_custom_call.1} parent=5 // pred_region
        %s187 = ssub.s32 %s18, 1
        // Predicated region
        $region13: #{tpu_custom_call.1} parent=11 // pred_check
          %p188 = pneg %p105
        $region14: #{tpu_custom_call.1} parent=11 // pred_check_branch
          %190 = sbr.rel (%p188) target = $region16
        $region15: #{tpu_custom_call.1} parent=11 // pred_region
          %s192 = ssub.s32 1024, 1024
          %193 = vsyncadd [#allocation7], %s192
          %s194 = sshll.u32 [#allocation6], 4
          %s195 = int_to_ptr.vmem [resolvable:$true] %s194
          %200 = dma.hbm_to_vmem [thread:$0]  %s2, 1024, %s195, [#allocation7], 64, 64, 4
        $region16: #{tpu_custom_call.1} parent=11 // pred_fallthru
          _
        // Predicated region
        $region17: #{tpu_custom_call.1} parent=11 // pred_check
          %p201 = pneg %p126
        $region18: #{tpu_custom_call.1} parent=11 // pred_check_branch
          %203 = sbr.rel (%p201) target = $region20
        $region19: #{tpu_custom_call.1} parent=11 // pred_region
          %s205 = ssub.s32 2048, 2048
          %206 = vsyncadd [#allocation7], %s205
          %s207 = sshll.u32 [#allocation8], 4
          %s208 = int_to_ptr.vmem [resolvable:$true] %s207
          %213 = dma.hbm_to_vmem [thread:$0]  %s3, 2048, %s208, [#allocation7], 128, 128, 8
        $region20: #{tpu_custom_call.1} parent=11 // pred_fallthru
          _
        // Predicated region
        $region21: #{tpu_custom_call.1} parent=11 // pred_check
          %p214 = pneg %p147
        $region22: #{tpu_custom_call.1} parent=11 // pred_check_branch
          %216 = sbr.rel (%p214) target = $region24
        $region23: #{tpu_custom_call.1} parent=11 // pred_region
          _
        $region24: #{tpu_custom_call.1} parent=11 // pred_fallthru
          _
      $region12: #{tpu_custom_call.1} parent=5 // pred_fallthru
        _
      %p217 = scmp.lt.s32.totalorder %s18, 4
      // Predicated region
      $region25: #{tpu_custom_call.1} parent=5 // pred_check
        %p218 = pneg %p217
      $region26: #{tpu_custom_call.1} parent=5 // pred_check_branch
        %220 = sbr.rel (%p218) target = $region28
      $region27: #{tpu_custom_call.1} parent=5 // pred_region
        // Predicated region
        $region29: #{tpu_custom_call.1} parent=27 // pred_check
          %p221 = pneg %p52
        $region30: #{tpu_custom_call.1} parent=27 // pred_check_branch
          %223 = sbr.rel (%p221) target = $region32
        $region31: #{tpu_custom_call.1} parent=27 // pred_region
          %s224 = sand.u32 %s42, 1
          %s225 = scalar_lea.sflag [#allocation4], %s224
          %s226 = sand.u32 %s42, 1
          %s227 = smul.addr %s226, 8
          %s228 = scalar_lea.vmem [#allocation3], %s227
          %s230 = ssub.s32 128, 128
          %231 = vsyncadd %s225, %s230
          %s232 = smul.addr %s25, 2
          %s233 = sadd.s32 %s26, %s232
          %s234 = smul.addr %s233, 128
          %s235 = scalar_lea.hbm %s0, %s234
          %s237 = sshll.u32 %s228, 4
          %s238 = int_to_ptr.vmem [resolvable:$true] %s237
          %240 = dma.hbm_to_vmem [thread:$0]  %s235, 128, %s238, %s225
        $region32: #{tpu_custom_call.1} parent=27 // pred_fallthru
          _
        // Predicated region
        $region33: #{tpu_custom_call.1} parent=27 // pred_check
          %p241 = pneg %p78
        $region34: #{tpu_custom_call.1} parent=27 // pred_check_branch
          %243 = sbr.rel (%p241) target = $region36
        $region35: #{tpu_custom_call.1} parent=27 // pred_region
          %p244 = scmp.lt.s32.totalorder %s25, 1
          %s245 = scalar_select %p244, %s25, 1
          %s246 = smul.addr %s245, 8
          %s247 = scalar_lea.vmem %s1, %s246
        $region36: #{tpu_custom_call.1} parent=27 // pred_fallthru
          _
      $region28: #{tpu_custom_call.1} parent=5 // pred_fallthru
        _
      %p248 = scmp.le.s32.totalorder 1, %s18
      %p249 = scmp.lt.s32.totalorder %s18, 5
      %p250 = pnand %p248, %p249
      %p251 = pneg %p250
      // Predicated region
      $region37: #{tpu_custom_call.1} parent=5 // pred_check
        _
      $region38: #{tpu_custom_call.1} parent=5 // pred_check_branch
        %253 = sbr.rel (%p250) target = $region40
      $region39: #{tpu_custom_call.1} parent=5 // pred_region
        %s254 = ssub.s32 %s18, 1
        %s255 = sand.u32 %s45, 1
        %s256 = scalar_lea.sflag [#allocation4], %s255
        %s257 = sand.u32 %s45, 1
        %s258 = smul.addr %s257, 8
        %s259 = scalar_lea.vmem [#allocation3], %s258
        // Predicated region
        $region41: #{tpu_custom_call.1} parent=39 // pred_check
          %p260 = pneg %p58
        $region42: #{tpu_custom_call.1} parent=39 // pred_check_branch
          %262 = sbr.rel (%p260) target = $region44
        $region43: #{tpu_custom_call.1} parent=39 // pred_region
          %263 = dma.done %s256, 128
        $region44: #{tpu_custom_call.1} parent=39 // pred_fallthru
          _
        // Predicated region
        $region45: #{tpu_custom_call.1} parent=39 // pred_check
          %p264 = pneg %p105
        $region46: #{tpu_custom_call.1} parent=39 // pred_check_branch
          %266 = sbr.rel (%p264) target = $region48
        $region47: #{tpu_custom_call.1} parent=39 // pred_region
          %267 = dma.done [#allocation7], 1024
        $region48: #{tpu_custom_call.1} parent=39 // pred_fallthru
          _
        // Predicated region
        $region49: #{tpu_custom_call.1} parent=39 // pred_check
          %p268 = pneg %p126
        $region50: #{tpu_custom_call.1} parent=39 // pred_check_branch
          %270 = sbr.rel (%p268) target = $region52
        $region51: #{tpu_custom_call.1} parent=39 // pred_region
          %271 = dma.done [#allocation7], 2048
        $region52: #{tpu_custom_call.1} parent=39 // pred_fallthru
          _
        %s272 = sand.u32 %s45, 1
        %s273 = scalar_lea.sflag [#allocation4], %s272
        %s274 = sand.u32 %s45, 1
        %s275 = smul.addr %s274, 8
        %s276 = scalar_lea.vmem [#allocation3], %s275
        %p277 = pneg %p58
        %p278 = pneg %p55
        %p279 = scmp.lt.s32.totalorder %s27, 1
        %s280 = scalar_select %p279, %s27, 1
        %s281 = smul.addr %s280, 8
        %s282 = scalar_lea.vmem %s1, %s281
        %p283 = pneg %p84
        %p284 = pneg %p81
        %p285 = pneg %p105
        %p286 = pneg %p102
        %p287 = pneg %p126
        %p288 = pneg %p123
        %p289 = pneg %p147
        %p290 = pneg %p144
        %p291 = pneg %p173
        %p292 = pneg %p170
        %s293 = sand.u32 %s160, 1
        %s294 = scalar_lea.sflag [#allocation5], %s293
        %s295 = sand.u32 %s160, 1
        %s296 = smul.addr %s295, 8
        %s297 = scalar_lea.vmem [#allocation9], %s296
        %p298 = scmp.lt.s32.totalorder %s27, 1
        %s299 = scalar_select %p298, %s27, 1
        %s300 = smul.addr %s299, 8
        %s301 = scalar_lea.vmem %s1, %s300
        %p303 = scmp.eq.s32.totalorder %s28, 0
        // Predicated region
        $region53: #{tpu_custom_call.1} parent=39 // pred_check
          %p304 = pneg %p303
        $region54: #{tpu_custom_call.1} parent=39 // pred_check_branch
          %306 = sbr.rel (%p304) target = $region56
        $region55: #{tpu_custom_call.1} parent=39 // pred_region
          %307 = vst [vmem:[#allocation2] sm:$0xff] 0.0
        $region56: #{tpu_custom_call.1} parent=39 // pred_fallthru
          _
        %v308 = vld [vmem:[%s259] sm:$0xff]
        %v309 = vlaneseq
        %v310 = vand.u32 %v309, 127
        %v311 = vlaneseq
        %v312 = vshrl.u32 %v311, 7
        %v313 = vsub.s32 0, %v312
        %v314 = vrot.slane %v308, %v313
        %316 = vbcast.lane.b32.xlu0 %v314, 256
        %v317 = vpop.permute.xlu0 %316
        %s319 = sor.u32 256, 8
        %320 = vbcast.lane.b32.xlu0 %v314, %s319
        %v321 = vpop.permute.xlu0 %320
        %s323 = sor.u32 256, 16
        %324 = vbcast.lane.b32.xlu0 %v314, %s323
        %v325 = vpop.permute.xlu0 %324
        %s327 = sor.u32 256, 24
        %328 = vbcast.lane.b32.xlu0 %v314, %s327
        %v329 = vpop.permute.xlu0 %328
        %s331 = sor.u32 256, 32
        %332 = vbcast.lane.b32.xlu0 %v314, %s331
        %v333 = vpop.permute.xlu0 %332
        %s335 = sor.u32 256, 40
        %336 = vbcast.lane.b32.xlu0 %v314, %s335
        %v337 = vpop.permute.xlu0 %336
        %s339 = sor.u32 256, 48
        %340 = vbcast.lane.b32.xlu0 %v314, %s339
        %v341 = vpop.permute.xlu0 %340
        %s343 = sor.u32 256, 56
        %344 = vbcast.lane.b32.xlu0 %v314, %s343
        %v345 = vpop.permute.xlu0 %344
        %s347 = sor.u32 256, 64
        %348 = vbcast.lane.b32.xlu0 %v314, %s347
        %v349 = vpop.permute.xlu0 %348
        %s351 = sor.u32 256, 72
        %352 = vbcast.lane.b32.xlu0 %v314, %s351
        %v353 = vpop.permute.xlu0 %352
        %s355 = sor.u32 256, 80
        %356 = vbcast.lane.b32.xlu0 %v314, %s355
        %v357 = vpop.permute.xlu0 %356
        %s359 = sor.u32 256, 88
        %360 = vbcast.lane.b32.xlu0 %v314, %s359
        %v361 = vpop.permute.xlu0 %360
        %s363 = sor.u32 256, 96
        %364 = vbcast.lane.b32.xlu0 %v314, %s363
        %v365 = vpop.permute.xlu0 %364
        %s367 = sor.u32 256, 104
        %368 = vbcast.lane.b32.xlu0 %v314, %s367
        %v369 = vpop.permute.xlu0 %368
        %s371 = sor.u32 256, 112
        %372 = vbcast.lane.b32.xlu0 %v314, %s371
        %v373 = vpop.permute.xlu0 %372
        %s375 = sor.u32 256, 120
        %376 = vbcast.lane.b32.xlu0 %v314, %s375
        %v377 = vpop.permute.xlu0 %376
        %v378 = vlaneseq
        %v379 = vshrl.u32 %v378, 7
        %v380 = vsub.s32 1, %v379
        %v381 = vrot.slane %v308, %v380
        %383 = vbcast.lane.b32.xlu0 %v381, 256
        %v384 = vpop.permute.xlu0 %383
        %s386 = sor.u32 256, 8
        %387 = vbcast.lane.b32.xlu0 %v381, %s386
        %v388 = vpop.permute.xlu0 %387
        %s390 = sor.u32 256, 16
        %391 = vbcast.lane.b32.xlu0 %v381, %s390
        %v392 = vpop.permute.xlu0 %391
        %s394 = sor.u32 256, 24
        %395 = vbcast.lane.b32.xlu0 %v381, %s394
        %v396 = vpop.permute.xlu0 %395
        %s398 = sor.u32 256, 32
        %399 = vbcast.lane.b32.xlu0 %v381, %s398
        %v400 = vpop.permute.xlu0 %399
        %s402 = sor.u32 256, 40
        %403 = vbcast.lane.b32.xlu0 %v381, %s402
        %v404 = vpop.permute.xlu0 %403
        %s406 = sor.u32 256, 48
        %407 = vbcast.lane.b32.xlu0 %v381, %s406
        %v408 = vpop.permute.xlu0 %407
        %s410 = sor.u32 256, 56
        %411 = vbcast.lane.b32.xlu0 %v381, %s410
        %v412 = vpop.permute.xlu0 %411
        %s414 = sor.u32 256, 64
        %415 = vbcast.lane.b32.xlu0 %v381, %s414
        %v416 = vpop.permute.xlu0 %415
        %s418 = sor.u32 256, 72
        %419 = vbcast.lane.b32.xlu0 %v381, %s418
        %v420 = vpop.permute.xlu0 %419
        %s422 = sor.u32 256, 80
        %423 = vbcast.lane.b32.xlu0 %v381, %s422
        %v424 = vpop.permute.xlu0 %423
        %s426 = sor.u32 256, 88
        %427 = vbcast.lane.b32.xlu0 %v381, %s426
        %v428 = vpop.permute.xlu0 %427
        %s430 = sor.u32 256, 96
        %431 = vbcast.lane.b32.xlu0 %v381, %s430
        %v432 = vpop.permute.xlu0 %431
        %s434 = sor.u32 256, 104
        %435 = vbcast.lane.b32.xlu0 %v381, %s434
        %v436 = vpop.permute.xlu0 %435
        %s438 = sor.u32 256, 112
        %439 = vbcast.lane.b32.xlu0 %v381, %s438
        %v440 = vpop.permute.xlu0 %439
        %s442 = sor.u32 256, 120
        %443 = vbcast.lane.b32.xlu0 %v381, %s442
        %v444 = vpop.permute.xlu0 %443
        %v445 = vlaneseq
        %v446 = vshrl.u32 %v445, 7
        %v447 = vsub.s32 2, %v446
        %v448 = vrot.slane %v308, %v447
        %450 = vbcast.lane.b32.xlu0 %v448, 256
        %v451 = vpop.permute.xlu0 %450
        %s453 = sor.u32 256, 8
        %454 = vbcast.lane.b32.xlu0 %v448, %s453
        %v455 = vpop.permute.xlu0 %454
        %s457 = sor.u32 256, 16
        %458 = vbcast.lane.b32.xlu0 %v448, %s457
        %v459 = vpop.permute.xlu0 %458
        %s461 = sor.u32 256, 24
        %462 = vbcast.lane.b32.xlu0 %v448, %s461
        %v463 = vpop.permute.xlu0 %462
        %s465 = sor.u32 256, 32
        %466 = vbcast.lane.b32.xlu0 %v448, %s465
        %v467 = vpop.permute.xlu0 %466
        %s469 = sor.u32 256, 40
        %470 = vbcast.lane.b32.xlu0 %v448, %s469
        %v471 = vpop.permute.xlu0 %470
        %s473 = sor.u32 256, 48
        %474 = vbcast.lane.b32.xlu0 %v448, %s473
        %v475 = vpop.permute.xlu0 %474
        %s477 = sor.u32 256, 56
        %478 = vbcast.lane.b32.xlu0 %v448, %s477
        %v479 = vpop.permute.xlu0 %478
        %s481 = sor.u32 256, 64
        %482 = vbcast.lane.b32.xlu0 %v448, %s481
        %v483 = vpop.permute.xlu0 %482
        %s485 = sor.u32 256, 72
        %486 = vbcast.lane.b32.xlu0 %v448, %s485
        %v487 = vpop.permute.xlu0 %486
        %s489 = sor.u32 256, 80
        %490 = vbcast.lane.b32.xlu0 %v448, %s489
        %v491 = vpop.permute.xlu0 %490
        %s493 = sor.u32 256, 88
        %494 = vbcast.lane.b32.xlu0 %v448, %s493
        %v495 = vpop.permute.xlu0 %494
        %s497 = sor.u32 256, 96
        %498 = vbcast.lane.b32.xlu0 %v448, %s497
        %v499 = vpop.permute.xlu0 %498
        %s501 = sor.u32 256, 104
        %502 = vbcast.lane.b32.xlu0 %v448, %s501
        %v503 = vpop.permute.xlu0 %502
        %s505 = sor.u32 256, 112
        %506 = vbcast.lane.b32.xlu0 %v448, %s505
        %v507 = vpop.permute.xlu0 %506
        %s509 = sor.u32 256, 120
        %510 = vbcast.lane.b32.xlu0 %v448, %s509
        %v511 = vpop.permute.xlu0 %510
        %v512 = vlaneseq
        %v513 = vshrl.u32 %v512, 7
        %v514 = vsub.s32 3, %v513
        %v515 = vrot.slane %v308, %v514
        %517 = vbcast.lane.b32.xlu0 %v515, 256
        %v518 = vpop.permute.xlu0 %517
        %s520 = sor.u32 256, 8
        %521 = vbcast.lane.b32.xlu0 %v515, %s520
        %v522 = vpop.permute.xlu0 %521
        %s524 = sor.u32 256, 16
        %525 = vbcast.lane.b32.xlu0 %v515, %s524
        %v526 = vpop.permute.xlu0 %525
        %s528 = sor.u32 256, 24
        %529 = vbcast.lane.b32.xlu0 %v515, %s528
        %v530 = vpop.permute.xlu0 %529
        %s532 = sor.u32 256, 32
        %533 = vbcast.lane.b32.xlu0 %v515, %s532
        %v534 = vpop.permute.xlu0 %533
        %s536 = sor.u32 256, 40
        %537 = vbcast.lane.b32.xlu0 %v515, %s536
        %v538 = vpop.permute.xlu0 %537
        %s540 = sor.u32 256, 48
        %541 = vbcast.lane.b32.xlu0 %v515, %s540
        %v542 = vpop.permute.xlu0 %541
        %s544 = sor.u32 256, 56
        %545 = vbcast.lane.b32.xlu0 %v515, %s544
        %v546 = vpop.permute.xlu0 %545
        %s548 = sor.u32 256, 64
        %549 = vbcast.lane.b32.xlu0 %v515, %s548
        %v550 = vpop.permute.xlu0 %549
        %s552 = sor.u32 256, 72
        %553 = vbcast.lane.b32.xlu0 %v515, %s552
        %v554 = vpop.permute.xlu0 %553
        %s556 = sor.u32 256, 80
        %557 = vbcast.lane.b32.xlu0 %v515, %s556
        %v558 = vpop.permute.xlu0 %557
        %s560 = sor.u32 256, 88
        %561 = vbcast.lane.b32.xlu0 %v515, %s560
        %v562 = vpop.permute.xlu0 %561
        %s564 = sor.u32 256, 96
        %565 = vbcast.lane.b32.xlu0 %v515, %s564
        %v566 = vpop.permute.xlu0 %565
        %s568 = sor.u32 256, 104
        %569 = vbcast.lane.b32.xlu0 %v515, %s568
        %v570 = vpop.permute.xlu0 %569
        %s572 = sor.u32 256, 112
        %573 = vbcast.lane.b32.xlu0 %v515, %s572
        %v574 = vpop.permute.xlu0 %573
        %s576 = sor.u32 256, 120
        %577 = vbcast.lane.b32.xlu0 %v515, %s576
        %v578 = vpop.permute.xlu0 %577
        %v579 = vlaneseq
        %v580 = vshrl.u32 %v579, 7
        %v581 = vsub.s32 4, %v580
        %v582 = vrot.slane %v308, %v581
        %584 = vbcast.lane.b32.xlu0 %v582, 256
        %v585 = vpop.permute.xlu0 %584
        %s587 = sor.u32 256, 8
        %588 = vbcast.lane.b32.xlu0 %v582, %s587
        %v589 = vpop.permute.xlu0 %588
        %s591 = sor.u32 256, 16
        %592 = vbcast.lane.b32.xlu0 %v582, %s591
        %v593 = vpop.permute.xlu0 %592
        %s595 = sor.u32 256, 24
        %596 = vbcast.lane.b32.xlu0 %v582, %s595
        %v597 = vpop.permute.xlu0 %596
        %s599 = sor.u32 256, 32
        %600 = vbcast.lane.b32.xlu0 %v582, %s599
        %v601 = vpop.permute.xlu0 %600
        %s603 = sor.u32 256, 40
        %604 = vbcast.lane.b32.xlu0 %v582, %s603
        %v605 = vpop.permute.xlu0 %604
        %s607 = sor.u32 256, 48
        %608 = vbcast.lane.b32.xlu0 %v582, %s607
        %v609 = vpop.permute.xlu0 %608
        %s611 = sor.u32 256, 56
        %612 = vbcast.lane.b32.xlu0 %v582, %s611
        %v613 = vpop.permute.xlu0 %612
        %s615 = sor.u32 256, 64
        %616 = vbcast.lane.b32.xlu0 %v582, %s615
        %v617 = vpop.permute.xlu0 %616
        %s619 = sor.u32 256, 72
        %620 = vbcast.lane.b32.xlu0 %v582, %s619
        %v621 = vpop.permute.xlu0 %620
        %s623 = sor.u32 256, 80
        %624 = vbcast.lane.b32.xlu0 %v582, %s623
        %v625 = vpop.permute.xlu0 %624
        %s627 = sor.u32 256, 88
        %628 = vbcast.lane.b32.xlu0 %v582, %s627
        %v629 = vpop.permute.xlu0 %628
        %s631 = sor.u32 256, 96
        %632 = vbcast.lane.b32.xlu0 %v582, %s631
        %v633 = vpop.permute.xlu0 %632
        %s635 = sor.u32 256, 104
        %636 = vbcast.lane.b32.xlu0 %v582, %s635
        %v637 = vpop.permute.xlu0 %636
        %s639 = sor.u32 256, 112
        %640 = vbcast.lane.b32.xlu0 %v582, %s639
        %v641 = vpop.permute.xlu0 %640
        %s643 = sor.u32 256, 120
        %644 = vbcast.lane.b32.xlu0 %v582, %s643
        %v645 = vpop.permute.xlu0 %644
        %v646 = vlaneseq
        %v647 = vshrl.u32 %v646, 7
        %v648 = vsub.s32 5, %v647
        %v649 = vrot.slane %v308, %v648
        %651 = vbcast.lane.b32.xlu0 %v649, 256
        %v652 = vpop.permute.xlu0 %651
        %s654 = sor.u32 256, 8
        %655 = vbcast.lane.b32.xlu0 %v649, %s654
        %v656 = vpop.permute.xlu0 %655
        %s658 = sor.u32 256, 16
        %659 = vbcast.lane.b32.xlu0 %v649, %s658
        %v660 = vpop.permute.xlu0 %659
        %s662 = sor.u32 256, 24
        %663 = vbcast.lane.b32.xlu0 %v649, %s662
        %v664 = vpop.permute.xlu0 %663
        %s666 = sor.u32 256, 32
        %667 = vbcast.lane.b32.xlu0 %v649, %s666
        %v668 = vpop.permute.xlu0 %667
        %s670 = sor.u32 256, 40
        %671 = vbcast.lane.b32.xlu0 %v649, %s670
        %v672 = vpop.permute.xlu0 %671
        %s674 = sor.u32 256, 48
        %675 = vbcast.lane.b32.xlu0 %v649, %s674
        %v676 = vpop.permute.xlu0 %675
        %s678 = sor.u32 256, 56
        %679 = vbcast.lane.b32.xlu0 %v649, %s678
        %v680 = vpop.permute.xlu0 %679
        %s682 = sor.u32 256, 64
        %683 = vbcast.lane.b32.xlu0 %v649, %s682
        %v684 = vpop.permute.xlu0 %683
        %s686 = sor.u32 256, 72
        %687 = vbcast.lane.b32.xlu0 %v649, %s686
        %v688 = vpop.permute.xlu0 %687
        %s690 = sor.u32 256, 80
        %691 = vbcast.lane.b32.xlu0 %v649, %s690
        %v692 = vpop.permute.xlu0 %691
        %s694 = sor.u32 256, 88
        %695 = vbcast.lane.b32.xlu0 %v649, %s694
        %v696 = vpop.permute.xlu0 %695
        %s698 = sor.u32 256, 96
        %699 = vbcast.lane.b32.xlu0 %v649, %s698
        %v700 = vpop.permute.xlu0 %699
        %s702 = sor.u32 256, 104
        %703 = vbcast.lane.b32.xlu0 %v649, %s702
        %v704 = vpop.permute.xlu0 %703
        %s706 = sor.u32 256, 112
        %707 = vbcast.lane.b32.xlu0 %v649, %s706
        %v708 = vpop.permute.xlu0 %707
        %s710 = sor.u32 256, 120
        %711 = vbcast.lane.b32.xlu0 %v649, %s710
        %v712 = vpop.permute.xlu0 %711
        %v713 = vlaneseq
        %v714 = vshrl.u32 %v713, 7
        %v715 = vsub.s32 6, %v714
        %v716 = vrot.slane %v308, %v715
        %718 = vbcast.lane.b32.xlu0 %v716, 256
        %v719 = vpop.permute.xlu0 %718
        %s721 = sor.u32 256, 8
        %722 = vbcast.lane.b32.xlu0 %v716, %s721
        %v723 = vpop.permute.xlu0 %722
        %s725 = sor.u32 256, 16
        %726 = vbcast.lane.b32.xlu0 %v716, %s725
        %v727 = vpop.permute.xlu0 %726
        %s729 = sor.u32 256, 24
        %730 = vbcast.lane.b32.xlu0 %v716, %s729
        %v731 = vpop.permute.xlu0 %730
        %s733 = sor.u32 256, 32
        %734 = vbcast.lane.b32.xlu0 %v716, %s733
        %v735 = vpop.permute.xlu0 %734
        %s737 = sor.u32 256, 40
        %738 = vbcast.lane.b32.xlu0 %v716, %s737
        %v739 = vpop.permute.xlu0 %738
        %s741 = sor.u32 256, 48
        %742 = vbcast.lane.b32.xlu0 %v716, %s741
        %v743 = vpop.permute.xlu0 %742
        %s745 = sor.u32 256, 56
        %746 = vbcast.lane.b32.xlu0 %v716, %s745
        %v747 = vpop.permute.xlu0 %746
        %s749 = sor.u32 256, 64
        %750 = vbcast.lane.b32.xlu0 %v716, %s749
        %v751 = vpop.permute.xlu0 %750
        %s753 = sor.u32 256, 72
        %754 = vbcast.lane.b32.xlu0 %v716, %s753
        %v755 = vpop.permute.xlu0 %754
        %s757 = sor.u32 256, 80
        %758 = vbcast.lane.b32.xlu0 %v716, %s757
        %v759 = vpop.permute.xlu0 %758
        %s761 = sor.u32 256, 88
        %762 = vbcast.lane.b32.xlu0 %v716, %s761
        %v763 = vpop.permute.xlu0 %762
        %s765 = sor.u32 256, 96
        %766 = vbcast.lane.b32.xlu0 %v716, %s765
        %v767 = vpop.permute.xlu0 %766
        %s769 = sor.u32 256, 104
        %770 = vbcast.lane.b32.xlu0 %v716, %s769
        %v771 = vpop.permute.xlu0 %770
        %s773 = sor.u32 256, 112
        %774 = vbcast.lane.b32.xlu0 %v716, %s773
        %v775 = vpop.permute.xlu0 %774
        %s777 = sor.u32 256, 120
        %778 = vbcast.lane.b32.xlu0 %v716, %s777
        %v779 = vpop.permute.xlu0 %778
        %v780 = vlaneseq
        %v781 = vshrl.u32 %v780, 7
        %v782 = vsub.s32 7, %v781
        %v783 = vrot.slane %v308, %v782
        %785 = vbcast.lane.b32.xlu0 %v783, 256
        %v786 = vpop.permute.xlu0 %785
        %s788 = sor.u32 256, 8
        %789 = vbcast.lane.b32.xlu0 %v783, %s788
        %v790 = vpop.permute.xlu0 %789
        %s792 = sor.u32 256, 16
        %793 = vbcast.lane.b32.xlu0 %v783, %s792
        %v794 = vpop.permute.xlu0 %793
        %s796 = sor.u32 256, 24
        %797 = vbcast.lane.b32.xlu0 %v783, %s796
        %v798 = vpop.permute.xlu0 %797
        %s800 = sor.u32 256, 32
        %801 = vbcast.lane.b32.xlu0 %v783, %s800
        %v802 = vpop.permute.xlu0 %801
        %s804 = sor.u32 256, 40
        %805 = vbcast.lane.b32.xlu0 %v783, %s804
        %v806 = vpop.permute.xlu0 %805
        %s808 = sor.u32 256, 48
        %809 = vbcast.lane.b32.xlu0 %v783, %s808
        %v810 = vpop.permute.xlu0 %809
        %s812 = sor.u32 256, 56
        %813 = vbcast.lane.b32.xlu0 %v783, %s812
        %v814 = vpop.permute.xlu0 %813
        %s816 = sor.u32 256, 64
        %817 = vbcast.lane.b32.xlu0 %v783, %s816
        %v818 = vpop.permute.xlu0 %817
        %s820 = sor.u32 256, 72
        %821 = vbcast.lane.b32.xlu0 %v783, %s820
        %v822 = vpop.permute.xlu0 %821
        %s824 = sor.u32 256, 80
        %825 = vbcast.lane.b32.xlu0 %v783, %s824
        %v826 = vpop.permute.xlu0 %825
        %s828 = sor.u32 256, 88
        %829 = vbcast.lane.b32.xlu0 %v783, %s828
        %v830 = vpop.permute.xlu0 %829
        %s832 = sor.u32 256, 96
        %833 = vbcast.lane.b32.xlu0 %v783, %s832
        %v834 = vpop.permute.xlu0 %833
        %s836 = sor.u32 256, 104
        %837 = vbcast.lane.b32.xlu0 %v783, %s836
        %v838 = vpop.permute.xlu0 %837
        %s840 = sor.u32 256, 112
        %841 = vbcast.lane.b32.xlu0 %v783, %s840
        %v842 = vpop.permute.xlu0 %841
        %s844 = sor.u32 256, 120
        %845 = vbcast.lane.b32.xlu0 %v783, %s844
        %v846 = vpop.permute.xlu0 %845
        %vm847 = vcmp.eq.s32.totalorder %v317, %v310
        %vm848 = vcmp.eq.s32.totalorder %v321, %v310
        %vm849 = vcmp.eq.s32.totalorder %v325, %v310
        %vm850 = vcmp.eq.s32.totalorder %v329, %v310
        %vm851 = vcmp.eq.s32.totalorder %v333, %v310
        %vm852 = vcmp.eq.s32.totalorder %v337, %v310
        %vm853 = vcmp.eq.s32.totalorder %v341, %v310
        %vm854 = vcmp.eq.s32.totalorder %v345, %v310
        %vm855 = vcmp.eq.s32.totalorder %v349, %v310
        %vm856 = vcmp.eq.s32.totalorder %v353, %v310
        %vm857 = vcmp.eq.s32.totalorder %v357, %v310
        %vm858 = vcmp.eq.s32.totalorder %v361, %v310
        %vm859 = vcmp.eq.s32.totalorder %v365, %v310
        %vm860 = vcmp.eq.s32.totalorder %v369, %v310
        %vm861 = vcmp.eq.s32.totalorder %v373, %v310
        %vm862 = vcmp.eq.s32.totalorder %v377, %v310
        %vm863 = vcmp.eq.s32.totalorder %v384, %v310
        %vm864 = vcmp.eq.s32.totalorder %v388, %v310
        %vm865 = vcmp.eq.s32.totalorder %v392, %v310
        %vm866 = vcmp.eq.s32.totalorder %v396, %v310
        %vm867 = vcmp.eq.s32.totalorder %v400, %v310
        %vm868 = vcmp.eq.s32.totalorder %v404, %v310
        %vm869 = vcmp.eq.s32.totalorder %v408, %v310
        %vm870 = vcmp.eq.s32.totalorder %v412, %v310
        %vm871 = vcmp.eq.s32.totalorder %v416, %v310
        %vm872 = vcmp.eq.s32.totalorder %v420, %v310
        %vm873 = vcmp.eq.s32.totalorder %v424, %v310
        %vm874 = vcmp.eq.s32.totalorder %v428, %v310
        %vm875 = vcmp.eq.s32.totalorder %v432, %v310
        %vm876 = vcmp.eq.s32.totalorder %v436, %v310
        %vm877 = vcmp.eq.s32.totalorder %v440, %v310
        %vm878 = vcmp.eq.s32.totalorder %v444, %v310
        %vm879 = vcmp.eq.s32.totalorder %v451, %v310
        %vm880 = vcmp.eq.s32.totalorder %v455, %v310
        %vm881 = vcmp.eq.s32.totalorder %v459, %v310
        %vm882 = vcmp.eq.s32.totalorder %v463, %v310
        %vm883 = vcmp.eq.s32.totalorder %v467, %v310
        %vm884 = vcmp.eq.s32.totalorder %v471, %v310
        %vm885 = vcmp.eq.s32.totalorder %v475, %v310
        %vm886 = vcmp.eq.s32.totalorder %v479, %v310
        %vm887 = vcmp.eq.s32.totalorder %v483, %v310
        %vm888 = vcmp.eq.s32.totalorder %v487, %v310
        %vm889 = vcmp.eq.s32.totalorder %v491, %v310
        %vm890 = vcmp.eq.s32.totalorder %v495, %v310
        %vm891 = vcmp.eq.s32.totalorder %v499, %v310
        %vm892 = vcmp.eq.s32.totalorder %v503, %v310
        %vm893 = vcmp.eq.s32.totalorder %v507, %v310
        %vm894 = vcmp.eq.s32.totalorder %v511, %v310
        %vm895 = vcmp.eq.s32.totalorder %v518, %v310
        %vm896 = vcmp.eq.s32.totalorder %v522, %v310
        %vm897 = vcmp.eq.s32.totalorder %v526, %v310
        %vm898 = vcmp.eq.s32.totalorder %v530, %v310
        %vm899 = vcmp.eq.s32.totalorder %v534, %v310
        %vm900 = vcmp.eq.s32.totalorder %v538, %v310
        %vm901 = vcmp.eq.s32.totalorder %v542, %v310
        %vm902 = vcmp.eq.s32.totalorder %v546, %v310
        %vm903 = vcmp.eq.s32.totalorder %v550, %v310
        %vm904 = vcmp.eq.s32.totalorder %v554, %v310
        %vm905 = vcmp.eq.s32.totalorder %v558, %v310
        %vm906 = vcmp.eq.s32.totalorder %v562, %v310
        %vm907 = vcmp.eq.s32.totalorder %v566, %v310
        %vm908 = vcmp.eq.s32.totalorder %v570, %v310
        %vm909 = vcmp.eq.s32.totalorder %v574, %v310
        %vm910 = vcmp.eq.s32.totalorder %v578, %v310
        %vm911 = vcmp.eq.s32.totalorder %v585, %v310
        %vm912 = vcmp.eq.s32.totalorder %v589, %v310
        %vm913 = vcmp.eq.s32.totalorder %v593, %v310
        %vm914 = vcmp.eq.s32.totalorder %v597, %v310
        %vm915 = vcmp.eq.s32.totalorder %v601, %v310
        %vm916 = vcmp.eq.s32.totalorder %v605, %v310
        %vm917 = vcmp.eq.s32.totalorder %v609, %v310
        %vm918 = vcmp.eq.s32.totalorder %v613, %v310
        %vm919 = vcmp.eq.s32.totalorder %v617, %v310
        %vm920 = vcmp.eq.s32.totalorder %v621, %v310
        %vm921 = vcmp.eq.s32.totalorder %v625, %v310
        %vm922 = vcmp.eq.s32.totalorder %v629, %v310
        %vm923 = vcmp.eq.s32.totalorder %v633, %v310
        %vm924 = vcmp.eq.s32.totalorder %v637, %v310
        %vm925 = vcmp.eq.s32.totalorder %v641, %v310
        %vm926 = vcmp.eq.s32.totalorder %v645, %v310
        %vm927 = vcmp.eq.s32.totalorder %v652, %v310
        %vm928 = vcmp.eq.s32.totalorder %v656, %v310
        %vm929 = vcmp.eq.s32.totalorder %v660, %v310
        %vm930 = vcmp.eq.s32.totalorder %v664, %v310
        %vm931 = vcmp.eq.s32.totalorder %v668, %v310
        %vm932 = vcmp.eq.s32.totalorder %v672, %v310
        %vm933 = vcmp.eq.s32.totalorder %v676, %v310
        %vm934 = vcmp.eq.s32.totalorder %v680, %v310
        %vm935 = vcmp.eq.s32.totalorder %v684, %v310
        %vm936 = vcmp.eq.s32.totalorder %v688, %v310
        %vm937 = vcmp.eq.s32.totalorder %v692, %v310
        %vm938 = vcmp.eq.s32.totalorder %v696, %v310
        %vm939 = vcmp.eq.s32.totalorder %v700, %v310
        %vm940 = vcmp.eq.s32.totalorder %v704, %v310
        %vm941 = vcmp.eq.s32.totalorder %v708, %v310
        %vm942 = vcmp.eq.s32.totalorder %v712, %v310
        %vm943 = vcmp.eq.s32.totalorder %v719, %v310
        %vm944 = vcmp.eq.s32.totalorder %v723, %v310
        %vm945 = vcmp.eq.s32.totalorder %v727, %v310
        %vm946 = vcmp.eq.s32.totalorder %v731, %v310
        %vm947 = vcmp.eq.s32.totalorder %v735, %v310
        %vm948 = vcmp.eq.s32.totalorder %v739, %v310
        %vm949 = vcmp.eq.s32.totalorder %v743, %v310
        %vm950 = vcmp.eq.s32.totalorder %v747, %v310
        %vm951 = vcmp.eq.s32.totalorder %v751, %v310
        %vm952 = vcmp.eq.s32.totalorder %v755, %v310
        %vm953 = vcmp.eq.s32.totalorder %v759, %v310
        %vm954 = vcmp.eq.s32.totalorder %v763, %v310
        %vm955 = vcmp.eq.s32.totalorder %v767, %v310
        %vm956 = vcmp.eq.s32.totalorder %v771, %v310
        %vm957 = vcmp.eq.s32.totalorder %v775, %v310
        %vm958 = vcmp.eq.s32.totalorder %v779, %v310
        %vm959 = vcmp.eq.s32.totalorder %v786, %v310
        %vm960 = vcmp.eq.s32.totalorder %v790, %v310
        %vm961 = vcmp.eq.s32.totalorder %v794, %v310
        %vm962 = vcmp.eq.s32.totalorder %v798, %v310
        %vm963 = vcmp.eq.s32.totalorder %v802, %v310
        %vm964 = vcmp.eq.s32.totalorder %v806, %v310
        %vm965 = vcmp.eq.s32.totalorder %v810, %v310
        %vm966 = vcmp.eq.s32.totalorder %v814, %v310
        %vm967 = vcmp.eq.s32.totalorder %v818, %v310
        %vm968 = vcmp.eq.s32.totalorder %v822, %v310
        %vm969 = vcmp.eq.s32.totalorder %v826, %v310
        %vm970 = vcmp.eq.s32.totalorder %v830, %v310
        %vm971 = vcmp.eq.s32.totalorder %v834, %v310
        %vm972 = vcmp.eq.s32.totalorder %v838, %v310
        %vm973 = vcmp.eq.s32.totalorder %v842, %v310
        %vm974 = vcmp.eq.s32.totalorder %v846, %v310
        %v975 = vsel %vm847, 1, 0
        %v976 = vsel %vm848, 1, 0
        %v977 = vsel %vm849, 1, 0
        %v978 = vsel %vm850, 1, 0
        %v979 = vsel %vm851, 1, 0
        %v980 = vsel %vm852, 1, 0
        %v981 = vsel %vm853, 1, 0
        %v982 = vsel %vm854, 1, 0
        %v983 = vsel %vm855, 1, 0
        %v984 = vsel %vm856, 1, 0
        %v985 = vsel %vm857, 1, 0
        %v986 = vsel %vm858, 1, 0
        %v987 = vsel %vm859, 1, 0
        %v988 = vsel %vm860, 1, 0
        %v989 = vsel %vm861, 1, 0
        %v990 = vsel %vm862, 1, 0
        %v991 = vsel %vm863, 1, 0
        %v992 = vsel %vm864, 1, 0
        %v993 = vsel %vm865, 1, 0
        %v994 = vsel %vm866, 1, 0
        %v995 = vsel %vm867, 1, 0
        %v996 = vsel %vm868, 1, 0
        %v997 = vsel %vm869, 1, 0
        %v998 = vsel %vm870, 1, 0
        %v999 = vsel %vm871, 1, 0
        %v1000 = vsel %vm872, 1, 0
        %v1001 = vsel %vm873, 1, 0
        %v1002 = vsel %vm874, 1, 0
        %v1003 = vsel %vm875, 1, 0
        %v1004 = vsel %vm876, 1, 0
        %v1005 = vsel %vm877, 1, 0
        %v1006 = vsel %vm878, 1, 0
        %v1007 = vsel %vm879, 1, 0
        %v1008 = vsel %vm880, 1, 0
        %v1009 = vsel %vm881, 1, 0
        %v1010 = vsel %vm882, 1, 0
        %v1011 = vsel %vm883, 1, 0
        %v1012 = vsel %vm884, 1, 0
        %v1013 = vsel %vm885, 1, 0
        %v1014 = vsel %vm886, 1, 0
        %v1015 = vsel %vm887, 1, 0
        %v1016 = vsel %vm888, 1, 0
        %v1017 = vsel %vm889, 1, 0
        %v1018 = vsel %vm890, 1, 0
        %v1019 = vsel %vm891, 1, 0
        %v1020 = vsel %vm892, 1, 0
        %v1021 = vsel %vm893, 1, 0
        %v1022 = vsel %vm894, 1, 0
        %v1023 = vsel %vm895, 1, 0
        %v1024 = vsel %vm896, 1, 0
        %v1025 = vsel %vm897, 1, 0
        %v1026 = vsel %vm898, 1, 0
        %v1027 = vsel %vm899, 1, 0
        %v1028 = vsel %vm900, 1, 0
        %v1029 = vsel %vm901, 1, 0
        %v1030 = vsel %vm902, 1, 0
        %v1031 = vsel %vm903, 1, 0
        %v1032 = vsel %vm904, 1, 0
        %v1033 = vsel %vm905, 1, 0
        %v1034 = vsel %vm906, 1, 0
        %v1035 = vsel %vm907, 1, 0
        %v1036 = vsel %vm908, 1, 0
        %v1037 = vsel %vm909, 1, 0
        %v1038 = vsel %vm910, 1, 0
        %v1039 = vsel %vm911, 1, 0
        %v1040 = vsel %vm912, 1, 0
        %v1041 = vsel %vm913, 1, 0
        %v1042 = vsel %vm914, 1, 0
        %v1043 = vsel %vm915, 1, 0
        %v1044 = vsel %vm916, 1, 0
        %v1045 = vsel %vm917, 1, 0
        %v1046 = vsel %vm918, 1, 0
        %v1047 = vsel %vm919, 1, 0
        %v1048 = vsel %vm920, 1, 0
        %v1049 = vsel %vm921, 1, 0
        %v1050 = vsel %vm922, 1, 0
        %v1051 = vsel %vm923, 1, 0
        %v1052 = vsel %vm924, 1, 0
        %v1053 = vsel %vm925, 1, 0
        %v1054 = vsel %vm926, 1, 0
        %v1055 = vsel %vm927, 1, 0
        %v1056 = vsel %vm928, 1, 0
        %v1057 = vsel %vm929, 1, 0
        %v1058 = vsel %vm930, 1, 0
        %v1059 = vsel %vm931, 1, 0
        %v1060 = vsel %vm932, 1, 0
        %v1061 = vsel %vm933, 1, 0
        %v1062 = vsel %vm934, 1, 0
        %v1063 = vsel %vm935, 1, 0
        %v1064 = vsel %vm936, 1, 0
        %v1065 = vsel %vm937, 1, 0
        %v1066 = vsel %vm938, 1, 0
        %v1067 = vsel %vm939, 1, 0
        %v1068 = vsel %vm940, 1, 0
        %v1069 = vsel %vm941, 1, 0
        %v1070 = vsel %vm942, 1, 0
        %v1071 = vsel %vm943, 1, 0
        %v1072 = vsel %vm944, 1, 0
        %v1073 = vsel %vm945, 1, 0
        %v1074 = vsel %vm946, 1, 0
        %v1075 = vsel %vm947, 1, 0
        %v1076 = vsel %vm948, 1, 0
        %v1077 = vsel %vm949, 1, 0
        %v1078 = vsel %vm950, 1, 0
        %v1079 = vsel %vm951, 1, 0
        %v1080 = vsel %vm952, 1, 0
        %v1081 = vsel %vm953, 1, 0
        %v1082 = vsel %vm954, 1, 0
        %v1083 = vsel %vm955, 1, 0
        %v1084 = vsel %vm956, 1, 0
        %v1085 = vsel %vm957, 1, 0
        %v1086 = vsel %vm958, 1, 0
        %v1087 = vsel %vm959, 1, 0
        %v1088 = vsel %vm960, 1, 0
        %v1089 = vsel %vm961, 1, 0
        %v1090 = vsel %vm962, 1, 0
        %v1091 = vsel %vm963, 1, 0
        %v1092 = vsel %vm964, 1, 0
        %v1093 = vsel %vm965, 1, 0
        %v1094 = vsel %vm966, 1, 0
        %v1095 = vsel %vm967, 1, 0
        %v1096 = vsel %vm968, 1, 0
        %v1097 = vsel %vm969, 1, 0
        %v1098 = vsel %vm970, 1, 0
        %v1099 = vsel %vm971, 1, 0
        %v1100 = vsel %vm972, 1, 0
        %v1101 = vsel %vm973, 1, 0
        %v1102 = vsel %vm974, 1, 0
        %v1103 = vcvt.s32.f32 %v975
        %v1104 = vcvt.s32.f32 %v976
        %v1105 = vcvt.s32.f32 %v977
        %v1106 = vcvt.s32.f32 %v978
        %v1107 = vcvt.s32.f32 %v979
        %v1108 = vcvt.s32.f32 %v980
        %v1109 = vcvt.s32.f32 %v981
        %v1110 = vcvt.s32.f32 %v982
        %v1111 = vcvt.s32.f32 %v983
        %v1112 = vcvt.s32.f32 %v984
        %v1113 = vcvt.s32.f32 %v985
        %v1114 = vcvt.s32.f32 %v986
        %v1115 = vcvt.s32.f32 %v987
        %v1116 = vcvt.s32.f32 %v988
        %v1117 = vcvt.s32.f32 %v989
        %v1118 = vcvt.s32.f32 %v990
        %v1119 = vcvt.s32.f32 %v991
        %v1120 = vcvt.s32.f32 %v992
        %v1121 = vcvt.s32.f32 %v993
        %v1122 = vcvt.s32.f32 %v994
        %v1123 = vcvt.s32.f32 %v995
        %v1124 = vcvt.s32.f32 %v996
        %v1125 = vcvt.s32.f32 %v997
        %v1126 = vcvt.s32.f32 %v998
        %v1127 = vcvt.s32.f32 %v999
        %v1128 = vcvt.s32.f32 %v1000
        %v1129 = vcvt.s32.f32 %v1001
        %v1130 = vcvt.s32.f32 %v1002
        %v1131 = vcvt.s32.f32 %v1003
        %v1132 = vcvt.s32.f32 %v1004
        %v1133 = vcvt.s32.f32 %v1005
        %v1134 = vcvt.s32.f32 %v1006
        %v1135 = vcvt.s32.f32 %v1007
        %v1136 = vcvt.s32.f32 %v1008
        %v1137 = vcvt.s32.f32 %v1009
        %v1138 = vcvt.s32.f32 %v1010
        %v1139 = vcvt.s32.f32 %v1011
        %v1140 = vcvt.s32.f32 %v1012
        %v1141 = vcvt.s32.f32 %v1013
        %v1142 = vcvt.s32.f32 %v1014
        %v1143 = vcvt.s32.f32 %v1015
        %v1144 = vcvt.s32.f32 %v1016
        %v1145 = vcvt.s32.f32 %v1017
        %v1146 = vcvt.s32.f32 %v1018
        %v1147 = vcvt.s32.f32 %v1019
        %v1148 = vcvt.s32.f32 %v1020
        %v1149 = vcvt.s32.f32 %v1021
        %v1150 = vcvt.s32.f32 %v1022
        %v1151 = vcvt.s32.f32 %v1023
        %v1152 = vcvt.s32.f32 %v1024
        %v1153 = vcvt.s32.f32 %v1025
        %v1154 = vcvt.s32.f32 %v1026
        %v1155 = vcvt.s32.f32 %v1027
        %v1156 = vcvt.s32.f32 %v1028
        %v1157 = vcvt.s32.f32 %v1029
        %v1158 = vcvt.s32.f32 %v1030
        %v1159 = vcvt.s32.f32 %v1031
        %v1160 = vcvt.s32.f32 %v1032
        %v1161 = vcvt.s32.f32 %v1033
        %v1162 = vcvt.s32.f32 %v1034
        %v1163 = vcvt.s32.f32 %v1035
        %v1164 = vcvt.s32.f32 %v1036
        %v1165 = vcvt.s32.f32 %v1037
        %v1166 = vcvt.s32.f32 %v1038
        %v1167 = vcvt.s32.f32 %v1039
        %v1168 = vcvt.s32.f32 %v1040
        %v1169 = vcvt.s32.f32 %v1041
        %v1170 = vcvt.s32.f32 %v1042
        %v1171 = vcvt.s32.f32 %v1043
        %v1172 = vcvt.s32.f32 %v1044
        %v1173 = vcvt.s32.f32 %v1045
        %v1174 = vcvt.s32.f32 %v1046
        %v1175 = vcvt.s32.f32 %v1047
        %v1176 = vcvt.s32.f32 %v1048
        %v1177 = vcvt.s32.f32 %v1049
        %v1178 = vcvt.s32.f32 %v1050
        %v1179 = vcvt.s32.f32 %v1051
        %v1180 = vcvt.s32.f32 %v1052
        %v1181 = vcvt.s32.f32 %v1053
        %v1182 = vcvt.s32.f32 %v1054
        %v1183 = vcvt.s32.f32 %v1055
        %v1184 = vcvt.s32.f32 %v1056
        %v1185 = vcvt.s32.f32 %v1057
        %v1186 = vcvt.s32.f32 %v1058
        %v1187 = vcvt.s32.f32 %v1059
        %v1188 = vcvt.s32.f32 %v1060
        %v1189 = vcvt.s32.f32 %v1061
        %v1190 = vcvt.s32.f32 %v1062
        %v1191 = vcvt.s32.f32 %v1063
        %v1192 = vcvt.s32.f32 %v1064
        %v1193 = vcvt.s32.f32 %v1065
        %v1194 = vcvt.s32.f32 %v1066
        %v1195 = vcvt.s32.f32 %v1067
        %v1196 = vcvt.s32.f32 %v1068
        %v1197 = vcvt.s32.f32 %v1069
        %v1198 = vcvt.s32.f32 %v1070
        %v1199 = vcvt.s32.f32 %v1071
        %v1200 = vcvt.s32.f32 %v1072
        %v1201 = vcvt.s32.f32 %v1073
        %v1202 = vcvt.s32.f32 %v1074
        %v1203 = vcvt.s32.f32 %v1075
        %v1204 = vcvt.s32.f32 %v1076
        %v1205 = vcvt.s32.f32 %v1077
        %v1206 = vcvt.s32.f32 %v1078
        %v1207 = vcvt.s32.f32 %v1079
        %v1208 = vcvt.s32.f32 %v1080
        %v1209 = vcvt.s32.f32 %v1081
        %v1210 = vcvt.s32.f32 %v1082
        %v1211 = vcvt.s32.f32 %v1083
        %v1212 = vcvt.s32.f32 %v1084
        %v1213 = vcvt.s32.f32 %v1085
        %v1214 = vcvt.s32.f32 %v1086
        %v1215 = vcvt.s32.f32 %v1087
        %v1216 = vcvt.s32.f32 %v1088
        %v1217 = vcvt.s32.f32 %v1089
        %v1218 = vcvt.s32.f32 %v1090
        %v1219 = vcvt.s32.f32 %v1091
        %v1220 = vcvt.s32.f32 %v1092
        %v1221 = vcvt.s32.f32 %v1093
        %v1222 = vcvt.s32.f32 %v1094
        %v1223 = vcvt.s32.f32 %v1095
        %v1224 = vcvt.s32.f32 %v1096
        %v1225 = vcvt.s32.f32 %v1097
        %v1226 = vcvt.s32.f32 %v1098
        %v1227 = vcvt.s32.f32 %v1099
        %v1228 = vcvt.s32.f32 %v1100
        %v1229 = vcvt.s32.f32 %v1101
        %v1230 = vcvt.s32.f32 %v1102
        %v1231 = vadd.f32 %v1103, %v1104
        %v1232 = vadd.f32 %v1231, %v1105
        %v1233 = vadd.f32 %v1232, %v1106
        %v1234 = vadd.f32 %v1233, %v1107
        %v1235 = vadd.f32 %v1234, %v1108
        %v1236 = vadd.f32 %v1235, %v1109
        %v1237 = vadd.f32 %v1236, %v1110
        %v1238 = vadd.f32 %v1237, %v1111
        %v1239 = vadd.f32 %v1238, %v1112
        %v1240 = vadd.f32 %v1239, %v1113
        %v1241 = vadd.f32 %v1240, %v1114
        %v1242 = vadd.f32 %v1241, %v1115
        %v1243 = vadd.f32 %v1242, %v1116
        %v1244 = vadd.f32 %v1243, %v1117
        %v1245 = vadd.f32 %v1244, %v1118
        %v1246 = vrot.slane %v1245, 4
        %v1247 = vadd.f32 %v1245, %v1246
        %v1248 = vrot.slane %v1247, 2
        %v1249 = vadd.f32 %v1247, %v1248
        %v1250 = vrot.slane %v1249, 1
        %v1251 = vadd.f32 %v1249, %v1250
        %v1252 = vadd.f32 %v1119, %v1120
        %v1253 = vadd.f32 %v1252, %v1121
        %v1254 = vadd.f32 %v1253, %v1122
        %v1255 = vadd.f32 %v1254, %v1123
        %v1256 = vadd.f32 %v1255, %v1124
        %v1257 = vadd.f32 %v1256, %v1125
        %v1258 = vadd.f32 %v1257, %v1126
        %v1259 = vadd.f32 %v1258, %v1127
        %v1260 = vadd.f32 %v1259, %v1128
        %v1261 = vadd.f32 %v1260, %v1129
        %v1262 = vadd.f32 %v1261, %v1130
        %v1263 = vadd.f32 %v1262, %v1131
        %v1264 = vadd.f32 %v1263, %v1132
        %v1265 = vadd.f32 %v1264, %v1133
        %v1266 = vadd.f32 %v1265, %v1134
        %v1267 = vrot.slane %v1266, 4
        %v1268 = vadd.f32 %v1266, %v1267
        %v1269 = vrot.slane %v1268, 2
        %v1270 = vadd.f32 %v1268, %v1269
        %v1271 = vrot.slane %v1270, 1
        %v1272 = vadd.f32 %v1270, %v1271
        %v1273 = vadd.f32 %v1135, %v1136
        %v1274 = vadd.f32 %v1273, %v1137
        %v1275 = vadd.f32 %v1274, %v1138
        %v1276 = vadd.f32 %v1275, %v1139
        %v1277 = vadd.f32 %v1276, %v1140
        %v1278 = vadd.f32 %v1277, %v1141
        %v1279 = vadd.f32 %v1278, %v1142
        %v1280 = vadd.f32 %v1279, %v1143
        %v1281 = vadd.f32 %v1280, %v1144
        %v1282 = vadd.f32 %v1281, %v1145
        %v1283 = vadd.f32 %v1282, %v1146
        %v1284 = vadd.f32 %v1283, %v1147
        %v1285 = vadd.f32 %v1284, %v1148
        %v1286 = vadd.f32 %v1285, %v1149
        %v1287 = vadd.f32 %v1286, %v1150
        %v1288 = vrot.slane %v1287, 4
        %v1289 = vadd.f32 %v1287, %v1288
        %v1290 = vrot.slane %v1289, 2
        %v1291 = vadd.f32 %v1289, %v1290
        %v1292 = vrot.slane %v1291, 1
        %v1293 = vadd.f32 %v1291, %v1292
        %v1294 = vadd.f32 %v1151, %v1152
        %v1295 = vadd.f32 %v1294, %v1153
        %v1296 = vadd.f32 %v1295, %v1154
        %v1297 = vadd.f32 %v1296, %v1155
        %v1298 = vadd.f32 %v1297, %v1156
        %v1299 = vadd.f32 %v1298, %v1157
        %v1300 = vadd.f32 %v1299, %v1158
        %v1301 = vadd.f32 %v1300, %v1159
        %v1302 = vadd.f32 %v1301, %v1160
        %v1303 = vadd.f32 %v1302, %v1161
        %v1304 = vadd.f32 %v1303, %v1162
        %v1305 = vadd.f32 %v1304, %v1163
        %v1306 = vadd.f32 %v1305, %v1164
        %v1307 = vadd.f32 %v1306, %v1165
        %v1308 = vadd.f32 %v1307, %v1166
        %v1309 = vrot.slane %v1308, 4
        %v1310 = vadd.f32 %v1308, %v1309
        %v1311 = vrot.slane %v1310, 2
        %v1312 = vadd.f32 %v1310, %v1311
        %v1313 = vrot.slane %v1312, 1
        %v1314 = vadd.f32 %v1312, %v1313
        %v1315 = vadd.f32 %v1167, %v1168
        %v1316 = vadd.f32 %v1315, %v1169
        %v1317 = vadd.f32 %v1316, %v1170
        %v1318 = vadd.f32 %v1317, %v1171
        %v1319 = vadd.f32 %v1318, %v1172
        %v1320 = vadd.f32 %v1319, %v1173
        %v1321 = vadd.f32 %v1320, %v1174
        %v1322 = vadd.f32 %v1321, %v1175
        %v1323 = vadd.f32 %v1322, %v1176
        %v1324 = vadd.f32 %v1323, %v1177
        %v1325 = vadd.f32 %v1324, %v1178
        %v1326 = vadd.f32 %v1325, %v1179
        %v1327 = vadd.f32 %v1326, %v1180
        %v1328 = vadd.f32 %v1327, %v1181
        %v1329 = vadd.f32 %v1328, %v1182
        %v1330 = vrot.slane %v1329, 4
        %v1331 = vadd.f32 %v1329, %v1330
        %v1332 = vrot.slane %v1331, 2
        %v1333 = vadd.f32 %v1331, %v1332
        %v1334 = vrot.slane %v1333, 1
        %v1335 = vadd.f32 %v1333, %v1334
        %v1336 = vadd.f32 %v1183, %v1184
        %v1337 = vadd.f32 %v1336, %v1185
        %v1338 = vadd.f32 %v1337, %v1186
        %v1339 = vadd.f32 %v1338, %v1187
        %v1340 = vadd.f32 %v1339, %v1188
        %v1341 = vadd.f32 %v1340, %v1189
        %v1342 = vadd.f32 %v1341, %v1190
        %v1343 = vadd.f32 %v1342, %v1191
        %v1344 = vadd.f32 %v1343, %v1192
        %v1345 = vadd.f32 %v1344, %v1193
        %v1346 = vadd.f32 %v1345, %v1194
        %v1347 = vadd.f32 %v1346, %v1195
        %v1348 = vadd.f32 %v1347, %v1196
        %v1349 = vadd.f32 %v1348, %v1197
        %v1350 = vadd.f32 %v1349, %v1198
        %v1351 = vrot.slane %v1350, 4
        %v1352 = vadd.f32 %v1350, %v1351
        %v1353 = vrot.slane %v1352, 2
        %v1354 = vadd.f32 %v1352, %v1353
        %v1355 = vrot.slane %v1354, 1
        %v1356 = vadd.f32 %v1354, %v1355
        %v1357 = vadd.f32 %v1199, %v1200
        %v1358 = vadd.f32 %v1357, %v1201
        %v1359 = vadd.f32 %v1358, %v1202
        %v1360 = vadd.f32 %v1359, %v1203
        %v1361 = vadd.f32 %v1360, %v1204
        %v1362 = vadd.f32 %v1361, %v1205
        %v1363 = vadd.f32 %v1362, %v1206
        %v1364 = vadd.f32 %v1363, %v1207
        %v1365 = vadd.f32 %v1364, %v1208
        %v1366 = vadd.f32 %v1365, %v1209
        %v1367 = vadd.f32 %v1366, %v1210
        %v1368 = vadd.f32 %v1367, %v1211
        %v1369 = vadd.f32 %v1368, %v1212
        %v1370 = vadd.f32 %v1369, %v1213
        %v1371 = vadd.f32 %v1370, %v1214
        %v1372 = vrot.slane %v1371, 4
        %v1373 = vadd.f32 %v1371, %v1372
        %v1374 = vrot.slane %v1373, 2
        %v1375 = vadd.f32 %v1373, %v1374
        %v1376 = vrot.slane %v1375, 1
        %v1377 = vadd.f32 %v1375, %v1376
        %v1378 = vadd.f32 %v1215, %v1216
        %v1379 = vadd.f32 %v1378, %v1217
        %v1380 = vadd.f32 %v1379, %v1218
        %v1381 = vadd.f32 %v1380, %v1219
        %v1382 = vadd.f32 %v1381, %v1220
        %v1383 = vadd.f32 %v1382, %v1221
        %v1384 = vadd.f32 %v1383, %v1222
        %v1385 = vadd.f32 %v1384, %v1223
        %v1386 = vadd.f32 %v1385, %v1224
        %v1387 = vadd.f32 %v1386, %v1225
        %v1388 = vadd.f32 %v1387, %v1226
        %v1389 = vadd.f32 %v1388, %v1227
        %v1390 = vadd.f32 %v1389, %v1228
        %v1391 = vadd.f32 %v1390, %v1229
        %v1392 = vadd.f32 %v1391, %v1230
        %v1393 = vrot.slane %v1392, 4
        %v1394 = vadd.f32 %v1392, %v1393
        %v1395 = vrot.slane %v1394, 2
        %v1396 = vadd.f32 %v1394, %v1395
        %v1397 = vrot.slane %v1396, 1
        %v1398 = vadd.f32 %v1396, %v1397
        %v1399 = vld [vmem:[#allocation2] sm:$0xff]
        %v1400 = vpack.c.bf16 %v1251, %v1251
        %v1401 = vpack.c.bf16 %v1272, %v1272
        %v1402 = vpack.c.bf16 %v1293, %v1293
        %v1403 = vpack.c.bf16 %v1314, %v1314
        %v1404 = vpack.c.bf16 %v1335, %v1335
        %v1405 = vpack.c.bf16 %v1356, %v1356
        %v1406 = vpack.c.bf16 %v1377, %v1377
        %v1407 = vpack.c.bf16 %v1398, %v1398
        %v1408 = vld [vmem:[#allocation6] sm:$0xf]
        %v1409 = vld [vmem:[#allocation6 + $0x4] sm:$0xf]
        %v1410 = vld [vmem:[#allocation6 + $0x8] sm:$0xf]
        %v1411 = vld [vmem:[#allocation6 + $0xc] sm:$0xf]
        %v1412 = vld [vmem:[#allocation6 + $0x10] sm:$0xf]
        %v1413 = vld [vmem:[#allocation6 + $0x14] sm:$0xf]
        %v1414 = vld [vmem:[#allocation6 + $0x18] sm:$0xf]
        %v1415 = vld [vmem:[#allocation6 + $0x1c] sm:$0xf]
        %v1416 = vld [vmem:[#allocation6 + $0x20] sm:$0xf]
        %v1417 = vld [vmem:[#allocation6 + $0x24] sm:$0xf]
        %v1418 = vld [vmem:[#allocation6 + $0x28] sm:$0xf]
        %v1419 = vld [vmem:[#allocation6 + $0x2c] sm:$0xf]
        %v1420 = vld [vmem:[#allocation6 + $0x30] sm:$0xf]
        %v1421 = vld [vmem:[#allocation6 + $0x34] sm:$0xf]
        %v1422 = vld [vmem:[#allocation6 + $0x38] sm:$0xf]
        %v1423 = vld [vmem:[#allocation6 + $0x3c] sm:$0xf]
        %v1432 = vunpack.c.l.b16 %v1400
        %v1433 = vunpack.c.l.b16 %v1401
        %v1434 = vunpack.c.l.b16 %v1402
        %v1435 = vunpack.c.l.b16 %v1403
        %v1436 = vunpack.c.l.b16 %v1404
        %v1437 = vunpack.c.l.b16 %v1405
        %v1438 = vunpack.c.l.b16 %v1406
        %v1439 = vunpack.c.l.b16 %v1407
        %vm1440 = vcmask 1041409
        %v1441 = vsel %vm1440, %v1433, %v1432
        %vm1442 = vcmask 1042434
        %v1443 = vsel %vm1442, %v1434, %v1441
        %vm1444 = vcmask 1043459
        %v1445 = vsel %vm1444, %v1435, %v1443
        %vm1446 = vcmask 1044484
        %v1447 = vsel %vm1446, %v1436, %v1445
        %vm1448 = vcmask 1045509
        %v1449 = vsel %vm1448, %v1437, %v1447
        %vm1450 = vcmask 1046534
        %v1451 = vsel %vm1450, %v1438, %v1449
        %vm1452 = vcmask 1047559
        %v1453 = vsel %vm1452, %v1439, %v1451
        %v1454 = vpack.c.b16 %v1453, %v1453
        %v1472 = vunpack.c.l.b16 %v1408
        %v1473 = vunpack.c.l.b16 %v1409
        %v1474 = vunpack.c.l.b16 %v1410
        %v1475 = vunpack.c.l.b16 %v1411
        %v1476 = vunpack.c.l.b16 %v1412
        %v1477 = vunpack.c.l.b16 %v1413
        %v1478 = vunpack.c.l.b16 %v1414
        %v1479 = vunpack.c.l.b16 %v1415
        %v1480 = vunpack.c.l.b16 %v1416
        %v1481 = vunpack.c.l.b16 %v1417
        %v1482 = vunpack.c.l.b16 %v1418
        %v1483 = vunpack.c.l.b16 %v1419
        %v1484 = vunpack.c.l.b16 %v1420
        %v1485 = vunpack.c.l.b16 %v1421
        %v1486 = vunpack.c.l.b16 %v1422
        %v1487 = vunpack.c.l.b16 %v1423
        %v1488 = vpack.c.b16 %v1473, %v1472
        %v1489 = vpack.c.b16 %v1475, %v1474
        %v1490 = vpack.c.b16 %v1477, %v1476
        %v1491 = vpack.c.b16 %v1479, %v1478
        %v1492 = vpack.c.b16 %v1481, %v1480
        %v1493 = vpack.c.b16 %v1483, %v1482
        %v1494 = vpack.c.b16 %v1485, %v1484
        %v1495 = vpack.c.b16 %v1487, %v1486
        %1504 = vmatprep.subr.bf16.mxu0 0
        %1505 = vmatpush1.bf16.msra.mxu0 %v1488
        %1506 = vmatprep.subr.bf16.mxu0 0
        %1507 = vmatpush1.bf16.msra.mxu0 %v1489
        %1508 = vmatprep.subr.bf16.mxu0 0
        %1509 = vmatpush1.bf16.msra.mxu0 %v1490
        %1510 = vmatprep.subr.bf16.mxu0 0
        %1511 = vmatpush1.bf16.msra.mxu0 %v1491
        %1512 = vmatprep.subr.bf16.mxu0 0
        %1513 = vmatpush1.bf16.msra.mxu0 %v1492
        %1514 = vmatprep.subr.bf16.mxu0 0
        %1515 = vmatpush1.bf16.msra.mxu0 %v1493
        %1516 = vmatprep.subr.bf16.mxu0 0
        %1517 = vmatpush1.bf16.msra.mxu0 %v1494
        %1518 = vmatprep.subr.bf16.mxu0 0
        %1519 = vmatpush1.bf16.msra.mxu0 %v1495
        %1520 = vmatprep.subr.bf16.mxu0 0
        %1521 = vmatpush1.bf16.msra.mxu0 0
        %1522 = vmatprep.subr.bf16.mxu0 0
        %1523 = vmatpush1.bf16.msra.mxu0 0
        %1524 = vmatprep.subr.bf16.mxu0 0
        %1525 = vmatpush1.bf16.msra.mxu0 0
        %1526 = vmatprep.subr.bf16.mxu0 0
        %1527 = vmatpush1.bf16.msra.mxu0 0
        %1528 = vmatprep.subr.bf16.mxu0 0
        %1529 = vmatpush1.bf16.msra.mxu0 0
        %1530 = vmatprep.subr.bf16.mxu0 0
        %1531 = vmatpush1.bf16.msra.mxu0 0
        %1532 = vmatprep.subr.bf16.mxu0 0
        %1533 = vmatpush1.bf16.msra.mxu0 0
        %1534 = vmatprep.subr.bf16.mxu0 0
        %1535 = vmatpush1.bf16.msra.mxu0 0
        %1536 = vmatprep.mubr.bf16.mxu0 0
        %1537 = vmatmul.mubr.bf16.gmra.mrb[0].mxu0 %v1454
        %v1538 = vpop.f32.mrb[0].mxu0
        %v1539 = vadd.f32 0.0, %v1538
        %v1540 = vpop.f32.mrb[0].mxu0
        %v1541 = vpop.f32.mrb[0].mxu0
        %v1542 = vpop.f32.mrb[0].mxu0
        %1543 = vdwg.mxu0
        %v1544 = vadd.f32 %v1399, %v1539
        %1545 = vst [vmem:[#allocation2] sm:$0xff] %v1544
        %p1546 = scmp.eq.s32.totalorder %s28, 1
        // Predicated region
        $region57: #{tpu_custom_call.1} parent=39 // pred_check
          %p1547 = pneg %p1546
        $region58: #{tpu_custom_call.1} parent=39 // pred_check_branch
          %1549 = sbr.rel (%p1547) target = $region60
        $region59: #{tpu_custom_call.1} parent=39 // pred_region
          %v1550 = vld [vmem:[#allocation2] sm:$0xff]
          %v1551 = vld [vmem:[#allocation8] sm:$0xff]
          %v1552 = vld [vmem:[#allocation8 + $0x8] sm:$0xff]
          %v1553 = vld [vmem:[#allocation8 + $0x10] sm:$0xff]
          %v1554 = vld [vmem:[#allocation8 + $0x18] sm:$0xff]
          %v1555 = vld [vmem:[#allocation8 + $0x20] sm:$0xff]
          %v1556 = vld [vmem:[#allocation8 + $0x28] sm:$0xff]
          %v1557 = vld [vmem:[#allocation8 + $0x30] sm:$0xff]
          %v1558 = vld [vmem:[#allocation8 + $0x38] sm:$0xff]
          %v1559 = vld [vmem:[#allocation8 + $0x40] sm:$0xff]
          %v1560 = vld [vmem:[#allocation8 + $0x48] sm:$0xff]
          %v1561 = vld [vmem:[#allocation8 + $0x50] sm:$0xff]
          %v1562 = vld [vmem:[#allocation8 + $0x58] sm:$0xff]
          %v1563 = vld [vmem:[#allocation8 + $0x60] sm:$0xff]
          %v1564 = vld [vmem:[#allocation8 + $0x68] sm:$0xff]
          %v1565 = vld [vmem:[#allocation8 + $0x70] sm:$0xff]
          %v1566 = vld [vmem:[#allocation8 + $0x78] sm:$0xff]
          %1567 = vmatprep.subr.mxu0 0.0
          %1568 = vmatpush1.msra.mxu0 %v1551
          %1569 = vmatprep.subr.mxu0 0.0
          %1570 = vmatpush1.msra.mxu0 %v1552
          %1571 = vmatprep.subr.mxu0 0.0
          %1572 = vmatpush1.msra.mxu0 %v1553
          %1573 = vmatprep.subr.mxu0 0.0
          %1574 = vmatpush1.msra.mxu0 %v1554
          %1575 = vmatprep.subr.mxu0 0.0
          %1576 = vmatpush1.msra.mxu0 %v1555
          %1577 = vmatprep.subr.mxu0 0.0
          %1578 = vmatpush1.msra.mxu0 %v1556
          %1579 = vmatprep.subr.mxu0 0.0
          %1580 = vmatpush1.msra.mxu0 %v1557
          %1581 = vmatprep.subr.mxu0 0.0
          %1582 = vmatpush1.msra.mxu0 %v1558
          %1583 = vmatprep.subr.mxu0 0.0
          %1584 = vmatpush1.msra.mxu0 %v1559
          %1585 = vmatprep.subr.mxu0 0.0
          %1586 = vmatpush1.msra.mxu0 %v1560
          %1587 = vmatprep.subr.mxu0 0.0
          %1588 = vmatpush1.msra.mxu0 %v1561
          %1589 = vmatprep.subr.mxu0 0.0
          %1590 = vmatpush1.msra.mxu0 %v1562
          %1591 = vmatprep.subr.mxu0 0.0
          %1592 = vmatpush1.msra.mxu0 %v1563
          %1593 = vmatprep.subr.mxu0 0.0
          %1594 = vmatpush1.msra.mxu0 %v1564
          %1595 = vmatprep.subr.mxu0 0.0
          %1596 = vmatpush1.msra.mxu0 %v1565
          %1597 = vmatprep.subr.mxu0 0.0
          %1598 = vmatpush1.msra.mxu0 %v1566
          %1599 = vmatprep.subr.mxu0 0.0
          %1600 = vmatpush1.msra.mxu0 0.0
          %1601 = vmatprep.subr.mxu0 0.0
          %1602 = vmatpush1.msra.mxu0 0.0
          %1603 = vmatprep.subr.mxu0 0.0
          %1604 = vmatpush1.msra.mxu0 0.0
          %1605 = vmatprep.subr.mxu0 0.0
          %1606 = vmatpush1.msra.mxu0 0.0
          %1607 = vmatprep.subr.mxu0 0.0
          %1608 = vmatpush1.msra.mxu0 0.0
          %1609 = vmatprep.subr.mxu0 0.0
          %1610 = vmatpush1.msra.mxu0 0.0
          %1611 = vmatprep.subr.mxu0 0.0
          %1612 = vmatpush1.msra.mxu0 0.0
          %1613 = vmatprep.subr.mxu0 0.0
          %1614 = vmatpush1.msra.mxu0 0.0
          %1615 = vmatprep.subr.mxu0 0.0
          %1616 = vmatpush1.msra.mxu0 0.0
          %1617 = vmatprep.subr.mxu0 0.0
          %1618 = vmatpush1.msra.mxu0 0.0
          %1619 = vmatprep.subr.mxu0 0.0
          %1620 = vmatpush1.msra.mxu0 0.0
          %1621 = vmatprep.subr.mxu0 0.0
          %1622 = vmatpush1.msra.mxu0 0.0
          %1623 = vmatprep.subr.mxu0 0.0
          %1624 = vmatpush1.msra.mxu0 0.0
          %1625 = vmatprep.subr.mxu0 0.0
          %1626 = vmatpush1.msra.mxu0 0.0
          %1627 = vmatprep.subr.mxu0 0.0
          %1628 = vmatpush1.msra.mxu0 0.0
          %1629 = vmatprep.subr.mxu0 0.0
          %1630 = vmatpush1.msra.mxu0 0.0
          %1631 = vmatprep.mubr.f32.mxu0 0.0
          %1632 = vmatmul.mubr.f32.gmra.mrb[0].mxu0 %v1550
          %v1633 = vpop.f32.mrb[0].mxu0
          %v1634 = vadd.f32 0.0, %v1633
          %v1635 = vpop.f32.mrb[0].mxu0
          %1636 = vdwg.mxu0
          %v1637 = vld [vmem:[%s301] sm:$0xff]
          %1639 = vset.pattern.permute.xlu0 0
          %1640 = vperm.xlu0 %1639, %v1637
          %v1641 = vpop.permute.xlu0 %1640
          %v1643 = vmul.f32 %v1634, %v1641
          %v1644 = vld [vmem:[%s4] sm:$0x1]
          %v1646 = vlaneseq
          %v1647 = vshrl.u32 %v1646, 7
          %v1648 = vsub.s32 0, %v1647
          %v1649 = vrot.slane %v1644, %v1648
          %v1651 = vadd.f32 %v1643, %v1649
          %1652 = vst [vmem:[%s297] sm:$0xff] %v1651
        $region60: #{tpu_custom_call.1} parent=39 // pred_fallthru
          _
        %s1653 = sand.u32 %s160, 1
        %s1654 = scalar_lea.sflag [#allocation5], %s1653
        %s1655 = sand.u32 %s160, 1
        %s1656 = smul.addr %s1655, 8
        %s1657 = scalar_lea.vmem [#allocation9], %s1656
        // Predicated region
        $region61: #{tpu_custom_call.1} parent=39 // pred_check
          %p1658 = pneg %p170
        $region62: #{tpu_custom_call.1} parent=39 // pred_check_branch
          %1660 = sbr.rel (%p1658) target = $region64
        $region63: #{tpu_custom_call.1} parent=39 // pred_region
          %s1662 = ssub.s32 128, 128
          %1663 = vsyncadd %s1654, %s1662
          %s1664 = smul.addr %s27, 128
          %s1665 = scalar_lea.hbm %s5, %s1664
          %s1667 = sshll.u32 %s1657, 4
          %s1668 = int_to_ptr.vmem [resolvable:$true] %s1667
          %1670 = dma.vmem_to_hbm [thread:$0]  %s1668, 128, %s1665, %s1654
        $region64: #{tpu_custom_call.1} parent=39 // pred_fallthru
          _
      $region40: #{tpu_custom_call.1} parent=5 // pred_fallthru
        _
      %p1671 = scmp.le.s32.totalorder 2, %s18
      // Predicated region
      $region65: #{tpu_custom_call.1} parent=5 // pred_check
        %p1672 = pneg %p1671
      $region66: #{tpu_custom_call.1} parent=5 // pred_check_branch
        %1674 = sbr.rel (%p1672) target = $region68
      $region67: #{tpu_custom_call.1} parent=5 // pred_region
        %s1675 = ssub.s32 %s18, 2
        // Predicated region
        $region69: #{tpu_custom_call.1} parent=67 // pred_check
          %p1676 = pneg %p176
        $region70: #{tpu_custom_call.1} parent=67 // pred_check_branch
          %1678 = sbr.rel (%p1676) target = $region72
        $region71: #{tpu_custom_call.1} parent=67 // pred_region
          %s1679 = sand.u32 %s161, 1
          %s1680 = scalar_lea.sflag [#allocation5], %s1679
          %s1681 = sand.u32 %s161, 1
          %s1682 = smul.addr %s1681, 8
          %s1683 = scalar_lea.vmem [#allocation9], %s1682
          %1684 = dma.done %s1680, 128
        $region72: #{tpu_custom_call.1} parent=67 // pred_fallthru
          _
      $region68: #{tpu_custom_call.1} parent=5 // pred_fallthru
        _
    $region6: #{tpu_custom_call.1} parent=1 // loop_footer
      %s22 = sadd.s32 1, %s18
    $region7: #{tpu_custom_call.1} parent=1 // loop_footer_branch
      %17 = sbr.rel target = $region3
    $region8: #{tpu_custom_call.1} parent=1 // loop_exit
      _
    %1685 = vsyncpa [#allocation4], 1
    %s1686 = scalar_lea.sflag [#allocation4], 1
    %1687 = vsyncpa %s1686, 1
    %1688 = vsyncpa [#allocation7], 1
    %1689 = vsyncpa [#allocation5], 1
    %s1690 = scalar_lea.sflag [#allocation5], 1
    %1691 = vsyncpa %s1690, 1

</llo_original>
